<compile_context>
chip_gen: v7x
topology: tpu7x:2x2x1
jax: 0.10.0
libtpu: 0.0.40
codegen_flags: <defaults>
</compile_context>

<pallas_src>
import functools
import math

import numpy as np
import jax
import jax.numpy as jnp
from jax.experimental import pallas as pl
from jax.experimental.pallas import tpu as pltpu


# ----------------------------------------------------------------------------
# Minimal irreps machinery (stand-in for e3nn.o3.Irreps).
# An irrep entry is (mul, l, parity) with parity in {+1 ('e'), -1 ('o')}.
# ----------------------------------------------------------------------------

def irrep_dim(entry):
    mul, l, _ = entry
    return mul * (2 * l + 1)


def irreps_dim(irreps):
    return sum(irrep_dim(e) for e in irreps)


def irreps_offsets(irreps):
    offs = [0]
    for e in irreps:
        offs.append(offs[-1] + irrep_dim(e))
    return offs


def wigner_3j(l1, l2, l3):
    """Real-basis Wigner 3j for the couplings used here.

    The couplings with one l == 0 are basis-independent and match
    e3nn.o3.wigner_3j exactly; (1,1,1) is the Levi-Civita coupling.
    """
    if l3 == 0 and l1 == l2:
        d = 2 * l1 + 1
        return (np.eye(d, dtype=np.float32) / np.sqrt(d)).reshape(d, d, 1)
    if l2 == 0 and l1 == l3:
        d = 2 * l1 + 1
        return (np.eye(d, dtype=np.float32) / np.sqrt(d)).reshape(d, 1, d)
    if l1 == 0 and l2 == l3:
        d = 2 * l2 + 1
        return (np.eye(d, dtype=np.float32) / np.sqrt(d)).reshape(1, d, d)
    if (l1, l2, l3) == (1, 1, 1):
        eps = np.zeros((3, 3, 3), np.float32)
        for a, b, c in ((0, 1, 2), (1, 2, 0), (2, 0, 1)):
            eps[a, b, c] = 1.0
            eps[a, c, b] = -1.0
        return eps / np.sqrt(6.0)
    # TODO(synk): general real-basis wigner_3j (needs e3nn's change-of-basis);
    # not required for the l <= 1 irreps exercised here.
    raise NotImplementedError(f"wigner_3j({l1},{l2},{l3}) not implemented")


def get_expansion_path(irrep_in, irrep_out_1, irrep_out_2):
    """Mirror of Expansion.get_expansion_path (rule: ir_in in ir_out1 * ir_out2)."""
    instructions = []
    for i, (mul_in, l_in, p_in) in enumerate(irrep_in):
        for j, (mul1, l1, p1) in enumerate(irrep_out_1):
            for k, (mul2, l2, p2) in enumerate(irrep_out_2):
                if abs(l1 - l2) <= l_in <= l1 + l2 and p_in == p1 * p2:
                    instructions.append([i, j, k, True, 1.0, [mul_in, mul1, mul2]])
    return instructions


# ----------------------------------------------------------------------------
# Pallas kernel
# ----------------------------------------------------------------------------

def _expansion_kernel(x_ref, wlin_ref, m_ref, bm_ref, o_ref, *,
                      mul0, num_path, num_bias, dim_in, lin_scale):
    x = x_ref[...].astype(jnp.float32)                              # (Bt, dim_in)
    wlin = wlin_ref[...].astype(jnp.float32)                        # (mul0, num_weights)

    # Per-sample path/bias weights: the o3.Linear to scalars only reads 0e channels.
    wvec = jnp.dot(x[:, :mul0], wlin,
                   preferred_element_type=jnp.float32) * lin_scale  # (Bt, num_weights)
    w_path = wvec[:, :num_path]                                     # (Bt, P)

    # z[b, q*P + p] = x[b, q] * w_path[b, p]  (q-major; each slab is P=128 lanes wide)
    z = jnp.concatenate([w_path * x[:, q:q + 1] for q in range(dim_in)], axis=-1)

    out = jnp.dot(z, m_ref[...], preferred_element_type=jnp.float32)
    if num_bias > 0:
        w_bias = wvec[:, num_path:num_path + num_bias]
        out = out + jnp.dot(w_bias, bm_ref[...], preferred_element_type=jnp.float32)

    o_ref[...] = out.astype(o_ref.dtype)


# ----------------------------------------------------------------------------
# Module
# ----------------------------------------------------------------------------

class ExpansionPallas:
    """JAX/Pallas port of HamGNN `Expansion` (internal_weights=False path).

    # TODO(synk): the e3nn `o3.Linear(irrep_in -> num_weights x 0e)` weight generator
    # is modeled as a plain linear over the scalar (0e) channels with 1/sqrt(fan_in)
    # normalization (the only coupling an equivariant linear to scalars can have);
    # e3nn's exact init scheme is not reproduced (weights are random here anyway).
    # TODO(synk): the internal_weights=True branch is not implemented (it is broken
    # in the source: `weights, bias_weights = None`).
    """

    def __init__(self, irrep_in, irrep_out_1, irrep_out_2, *, key):
        self.irrep_in = list(irrep_in)
        self.irrep_out_1 = list(irrep_out_1)
        self.irrep_out_2 = list(irrep_out_2)
        self.instructions = get_expansion_path(irrep_in, irrep_out_1, irrep_out_2)
        self.num_path_weight = sum(int(np.prod(ins[-1]))
                                   for ins in self.instructions if ins[3])
        self.num_bias = sum(int(np.prod(ins[-1][1:]))
                            for ins in self.instructions if ins[0] == 0)
        self.num_weights = self.num_path_weight + self.num_bias

        assert self.irrep_in[0][1] == 0, "first input irrep must be scalar (0e)"
        self.mul0 = self.irrep_in[0][0]
        self.lin_scale = 1.0 / math.sqrt(self.mul0)

        self.dim_in = irreps_dim(self.irrep_in)
        self.dim_out1 = irreps_dim(self.irrep_out_1)
        self.dim_out2 = irreps_dim(self.irrep_out_2)
        self.dim_out = self.dim_out1 * self.dim_out2

        # Stand-in for o3.Linear weights: scalar channels -> num_weights x 0e.
        self.w_lin = jax.random.normal(key, (self.mul0, self.num_weights),
                                       dtype=jnp.float32)

        m_flat, bm = self._build_coupling_constants()
        self.m_flat = jnp.asarray(m_flat)    # (dim_in * P, dim_out)
        self.bm = jnp.asarray(bm)            # (max(num_bias, 1), dim_out)

    def _build_coupling_constants(self):
        off_in = irreps_offsets(self.irrep_in)
        off1 = irreps_offsets(self.irrep_out_1)
        off2 = irreps_offsets(self.irrep_out_2)
        P = self.num_path_weight
        D2 = self.dim_out2
        M = np.zeros((self.dim_in, P, self.dim_out), np.float32)    # [q, p, o]
        Bm = np.zeros((max(self.num_bias, 1), self.dim_out), np.float32)
        fwi = 0
        bwi = 0
        for ins in self.instructions:
            i, j, k = ins[0], ins[1], ins[2]
            W, U, V = ins[-1]
            _, l_in, _ = self.irrep_in[i]
            _, l1, _ = self.irrep_out_1[j]
            _, l2, _ = self.irrep_out_2[k]
            din, d1, d2 = 2 * l_in + 1, 2 * l1 + 1, 2 * l2 + 1
            w3j = wigner_3j(l1, l2, l_in)
            for w in range(W):
                for u in range(U):
                    for v in range(V):
                        p = fwi + w * U * V + u * V + v
                        for ii in range(d1):
                            for jj in range(d2):
                                for kk in range(din):
                                    c = float(w3j[ii, jj, kk])
                                    if c == 0.0:
                                        continue
                                    q = off_in[i] + w * din + kk
                                    row = off1[j] + u * d1 + ii
                                    col = off2[k] + v * d2 + jj
                                    M[q, p, row * D2 + col] += c / W
            if i == 0:
                for u in range(U):
                    for v in range(V):
                        r = bwi + u * V + v
                        for ii in range(d1):
                            for jj in range(d2):
                                c = float(w3j[ii, jj, :].sum())
                                if c == 0.0:
                                    continue
                                row = off1[j] + u * d1 + ii
                                col = off2[k] + v * d2 + jj
                                Bm[r, row * D2 + col] += c / W
                bwi += U * V
            fwi += W * U * V
        return M.reshape(self.dim_in * P, self.dim_out), Bm

    def __call__(self, x_in, *, block_batch=256):
        assert block_batch % 8 == 0
        B, din = x_in.shape
        assert din == self.dim_in
        bt = B if B <= block_batch else block_batch
        grid = (pl.cdiv(B, bt),)

        kernel = functools.partial(
            _expansion_kernel,
            mul0=self.mul0, num_path=self.num_path_weight,
            num_bias=self.num_bias, dim_in=self.dim_in, lin_scale=self.lin_scale)

        k_rows = self.m_flat.shape[0]
        return pl.pallas_call(
            kernel,
            out_shape=jax.ShapeDtypeStruct((B, self.dim_out), x_in.dtype),
            grid=grid,
            in_specs=[
                pl.BlockSpec((bt, self.dim_in), lambda i: (i, 0)),
                pl.BlockSpec((self.mul0, self.num_weights), lambda i: (0, 0)),
                pl.BlockSpec((k_rows, self.dim_out), lambda i: (0, 0)),
                pl.BlockSpec((self.bm.shape[0], self.dim_out), lambda i: (0, 0)),
            ],
            out_specs=pl.BlockSpec((bt, self.dim_out), lambda i: (i, 0)),
            compiler_params=pltpu.CompilerParams(
                dimension_semantics=("parallel",),
            ),
        )(x_in, self.w_lin, self.m_flat, self.bm)


# ----------------------------------------------------------------------------
# Host-side references (numpy float64 -> no TPU matmul-precision ambiguity)
# ----------------------------------------------------------------------------

def expansion_ref_np(mod, x):
    """float64 numpy mirror of the PyTorch Expansion.forward (external weights)."""
    x = np.asarray(x, np.float64)
    B = x.shape[0]
    off_in = irreps_offsets(mod.irrep_in)
    w_lin = np.asarray(mod.w_lin, np.float64)
    wvec = (x[:, :mod.mul0] @ w_lin) * mod.lin_scale
    weights = wvec[:, :mod.num_path_weight]
    bias_weights = wvec[:, mod.num_path_weight:]
    x_in_s = [x[:, off_in[i]:off_in[i + 1]].reshape(B, mul, 2 * l + 1)
              for i, (mul, l, _) in enumerate(mod.irrep_in)]
    outputs = {}
    fwi = 0
    bwi = 0
    for ins in mod.instructions:
        i, j, k = ins[0], ins[1], ins[2]
        W, U, V = ins[-1]
        _, l_in, _ = mod.irrep_in[i]
        mul1, l1, _ = mod.irrep_out_1[j]
        mul2, l2, _ = mod.irrep_out_2[k]
        w3j = wigner_3j(l1, l2, l_in).astype(np.float64)
        n = W * U * V
        weight = weights[:, fwi:fwi + n].reshape(B, W, U, V)
        result = np.einsum('bwuv,bwk->buvk', weight, x_in_s[i])
        if i == 0:
            nb = U * V
            bw = bias_weights[:, bwi:bwi + nb].reshape(B, U, V)
            bwi += nb
            result = result + bw[..., None]
        result = np.einsum('ijk,buvk->buivj', w3j, result) / W
        fwi += n
        result = result.reshape(B, mul1 * (2 * l1 + 1), mul2 * (2 * l2 + 1))
        key = (j, k)
        outputs[key] = outputs[key] + result if key in outputs else result
    rows = []
    for j, (mul1, l1, _) in enumerate(mod.irrep_out_1):
        blocks = []
        for k, (mul2, l2, _) in enumerate(mod.irrep_out_2):
            d1, d2 = mul1 * (2 * l1 + 1), mul2 * (2 * l2 + 1)
            blocks.append(outputs.get((j, k), np.zeros((B, d1, d2))))
        rows.append(np.concatenate(blocks, axis=-1))
    return np.concatenate(rows, axis=-2).reshape(B, -1)


def expansion_via_constants_np(mod, x):
    """float64 numpy version of the folded (M_flat / Bm) formulation the kernel uses."""
    x = np.asarray(x, np.float64)
    w_lin = np.asarray(mod.w_lin, np.float64)
    m_flat = np.asarray(mod.m_flat, np.float64)
    bm = np.asarray(mod.bm, np.float64)
    wvec = (x[:, :mod.mul0] @ w_lin) * mod.lin_scale
    w_path = wvec[:, :mod.num_path_weight]
    w_bias = wvec[:, mod.num_path_weight:]
    z = np.concatenate([w_path * x[:, q:q + 1] for q in range(mod.dim_in)], axis=-1)
    out = z @ m_flat
    if mod.num_bias > 0:
        out = out + w_bias @ bm
    return out


# ----------------------------------------------------------------------------
# Demo / self-check
# ----------------------------------------------------------------------------

if __name__ == "__main__":
    key = jax.random.PRNGKey(0)
    k_w, k_x1, k_x2 = jax.random.split(key, 3)

    # Small HamGNN-style irreps: x_in = 4x0e + 4x1o (dim 16); the expansion produces
    # an (8 x 16) block matrix per sample -> flattened output width 128 (lane-dense).
    irrep_in = [(4, 0, 1), (4, 1, -1)]
    irrep_out_1 = [(2, 0, 1), (2, 1, -1)]
    irrep_out_2 = [(4, 0, 1), (4, 1, -1)]

    mod = ExpansionPallas(irrep_in, irrep_out_1, irrep_out_2, key=k_w)

    # (a) Host float64 check: the precomputed coupling constants reproduce the
    #     instruction-by-instruction einsum forward exactly.
    x_small = np.asarray(jax.random.normal(k_x1, (8, mod.dim_in), dtype=jnp.float32))
    ref_small = expansion_ref_np(mod, x_small)
    alt_small = expansion_via_constants_np(mod, x_small)
    assert np.allclose(ref_small, alt_small, atol=1e-9), "constant-matrix formulation mismatch"

    # (b) Pallas kernel vs float64 reference (single full-extent batch block).
    x = jax.random.normal(k_x1, (64, mod.dim_in), dtype=jnp.float32)
    out = jax.block_until_ready(mod(x))
    assert out.shape == (64, mod.dim_out) and out.dtype == jnp.float32
    ref = expansion_ref_np(mod, np.asarray(x))
    scale = np.max(np.abs(ref)) + 1e-6
    err = np.max(np.abs(np.asarray(out, np.float64) - ref))
    # 3e-2 * max|ref| budget covers MXU default (bf16-pass) matmul rounding.
    assert err <= 3e-2 * scale, f"kernel mismatch: max err {err} vs scale {scale}"

    # (c) Multi-block grid path with a partial (masked) last batch tile.
    x2 = jax.random.normal(k_x2, (200, mod.dim_in), dtype=jnp.float32)
    out2 = jax.block_until_ready(mod(x2, block_batch=64))
    ref2 = expansion_ref_np(mod, np.asarray(x2))
    scale2 = np.max(np.abs(ref2)) + 1e-6
    err2 = np.max(np.abs(np.asarray(out2, np.float64) - ref2))
    assert err2 <= 3e-2 * scale2, f"multi-block mismatch: max err {err2} vs scale {scale2}"

    print("KERNEL_OK")
</pallas_src>

<mosaic_0001>
module attributes {stable_mosaic.version = 11 : i64} {
  func.func @_expansion_kernel(%arg0: i32, %arg1: memref<64x16xf32, #tpu.memory_space<vmem>>, %arg2: memref<4x144xf32, #tpu.memory_space<vmem>>, %arg3: memref<2048x128xf32, #tpu.memory_space<vmem>>, %arg4: memref<16x128xf32, #tpu.memory_space<vmem>>, %arg5: memref<64x128xf32, #tpu.memory_space<vmem>>) attributes {dimension_semantics = [#tpu.dimension_semantics<parallel>], iteration_bounds = array<i64: 1>, scalar_prefetch = 0 : i64, scratch_operands = 0 : i64, tpu.core_type = #tpu.core_type<tc>, window_params = [{transform_indices = @transform_0, window_bounds = array<i64: 64, 16>}, {pipeline_mode = #tpu.pipeline_mode<synchronous>, transform_indices = @transform_1, window_bounds = array<i64: 4, 144>}, {pipeline_mode = #tpu.pipeline_mode<synchronous>, transform_indices = @transform_2, window_bounds = array<i64: 2048, 128>}, {pipeline_mode = #tpu.pipeline_mode<synchronous>, transform_indices = @transform_3, window_bounds = array<i64: 16, 128>}, {transform_indices = @transform_4, window_bounds = array<i64: 64, 128>}]} {
    %c0 = arith.constant 0 : index
    %c0_0 = arith.constant 0 : index
    %0 = vector.load %arg1[%c0, %c0_0] : memref<64x16xf32, #tpu.memory_space<vmem>>, vector<64x16xf32>
    %c0_1 = arith.constant 0 : index
    %c0_2 = arith.constant 0 : index
    %1 = vector.load %arg2[%c0_1, %c0_2] : memref<4x144xf32, #tpu.memory_space<vmem>>, vector<4x144xf32>
    %2 = vector.extract_strided_slice %0 {offsets = [0, 0], sizes = [64, 4], strides = [1, 1]} : vector<64x16xf32> to vector<64x4xf32>
    %cst = arith.constant dense<0.000000e+00> : vector<64x144xf32>
    %3 = tpu.matmul %2, %1, %cst {dimension_numbers = #tpu.dot_dimension_numbers<[1], [0], [0], [1], [0, 0, 1, 1], [], []>} : vector<64x4xf32>, vector<4x144xf32>, vector<64x144xf32> -> vector<64x144xf32>
    %cst_3 = arith.constant 5.000000e-01 : f32
    %4 = vector.broadcast %cst_3 : f32 to vector<64x144xf32>
    %5 = arith.mulf %3, %4 : vector<64x144xf32>
    %6 = vector.extract_strided_slice %5 {offsets = [0, 0], sizes = [64, 128], strides = [1, 1]} : vector<64x144xf32> to vector<64x128xf32>
    %7 = vector.extract_strided_slice %0 {offsets = [0, 0], sizes = [64, 1], strides = [1, 1]} : vector<64x16xf32> to vector<64x1xf32>
    %8 = vector.broadcast %7 : vector<64x1xf32> to vector<64x128xf32>
    %9 = arith.mulf %6, %8 : vector<64x128xf32>
    %10 = vector.extract_strided_slice %0 {offsets = [0, 1], sizes = [64, 1], strides = [1, 1]} : vector<64x16xf32> to vector<64x1xf32>
    %11 = vector.broadcast %10 : vector<64x1xf32> to vector<64x128xf32>
    %12 = arith.mulf %6, %11 : vector<64x128xf32>
    %13 = vector.extract_strided_slice %0 {offsets = [0, 2], sizes = [64, 1], strides = [1, 1]} : vector<64x16xf32> to vector<64x1xf32>
    %14 = vector.broadcast %13 : vector<64x1xf32> to vector<64x128xf32>
    %15 = arith.mulf %6, %14 : vector<64x128xf32>
    %16 = vector.extract_strided_slice %0 {offsets = [0, 3], sizes = [64, 1], strides = [1, 1]} : vector<64x16xf32> to vector<64x1xf32>
    %17 = vector.broadcast %16 : vector<64x1xf32> to vector<64x128xf32>
    %18 = arith.mulf %6, %17 : vector<64x128xf32>
    %19 = vector.extract_strided_slice %0 {offsets = [0, 4], sizes = [64, 1], strides = [1, 1]} : vector<64x16xf32> to vector<64x1xf32>
    %20 = vector.broadcast %19 : vector<64x1xf32> to vector<64x128xf32>
    %21 = arith.mulf %6, %20 : vector<64x128xf32>
    %22 = vector.extract_strided_slice %0 {offsets = [0, 5], sizes = [64, 1], strides = [1, 1]} : vector<64x16xf32> to vector<64x1xf32>
    %23 = vector.broadcast %22 : vector<64x1xf32> to vector<64x128xf32>
    %24 = arith.mulf %6, %23 : vector<64x128xf32>
    %25 = vector.extract_strided_slice %0 {offsets = [0, 6], sizes = [64, 1], strides = [1, 1]} : vector<64x16xf32> to vector<64x1xf32>
    %26 = vector.broadcast %25 : vector<64x1xf32> to vector<64x128xf32>
    %27 = arith.mulf %6, %26 : vector<64x128xf32>
    %28 = vector.extract_strided_slice %0 {offsets = [0, 7], sizes = [64, 1], strides = [1, 1]} : vector<64x16xf32> to vector<64x1xf32>
    %29 = vector.broadcast %28 : vector<64x1xf32> to vector<64x128xf32>
    %30 = arith.mulf %6, %29 : vector<64x128xf32>
    %31 = vector.extract_strided_slice %0 {offsets = [0, 8], sizes = [64, 1], strides = [1, 1]} : vector<64x16xf32> to vector<64x1xf32>
    %32 = vector.broadcast %31 : vector<64x1xf32> to vector<64x128xf32>
    %33 = arith.mulf %6, %32 : vector<64x128xf32>
    %34 = vector.extract_strided_slice %0 {offsets = [0, 9], sizes = [64, 1], strides = [1, 1]} : vector<64x16xf32> to vector<64x1xf32>
    %35 = vector.broadcast %34 : vector<64x1xf32> to vector<64x128xf32>
    %36 = arith.mulf %6, %35 : vector<64x128xf32>
    %37 = vector.extract_strided_slice %0 {offsets = [0, 10], sizes = [64, 1], strides = [1, 1]} : vector<64x16xf32> to vector<64x1xf32>
    %38 = vector.broadcast %37 : vector<64x1xf32> to vector<64x128xf32>
    %39 = arith.mulf %6, %38 : vector<64x128xf32>
    %40 = vector.extract_strided_slice %0 {offsets = [0, 11], sizes = [64, 1], strides = [1, 1]} : vector<64x16xf32> to vector<64x1xf32>
    %41 = vector.broadcast %40 : vector<64x1xf32> to vector<64x128xf32>
    %42 = arith.mulf %6, %41 : vector<64x128xf32>
    %43 = vector.extract_strided_slice %0 {offsets = [0, 12], sizes = [64, 1], strides = [1, 1]} : vector<64x16xf32> to vector<64x1xf32>
    %44 = vector.broadcast %43 : vector<64x1xf32> to vector<64x128xf32>
    %45 = arith.mulf %6, %44 : vector<64x128xf32>
    %46 = vector.extract_strided_slice %0 {offsets = [0, 13], sizes = [64, 1], strides = [1, 1]} : vector<64x16xf32> to vector<64x1xf32>
    %47 = vector.broadcast %46 : vector<64x1xf32> to vector<64x128xf32>
    %48 = arith.mulf %6, %47 : vector<64x128xf32>
    %49 = vector.extract_strided_slice %0 {offsets = [0, 14], sizes = [64, 1], strides = [1, 1]} : vector<64x16xf32> to vector<64x1xf32>
    %50 = vector.broadcast %49 : vector<64x1xf32> to vector<64x128xf32>
    %51 = arith.mulf %6, %50 : vector<64x128xf32>
    %52 = vector.extract_strided_slice %0 {offsets = [0, 15], sizes = [64, 1], strides = [1, 1]} : vector<64x16xf32> to vector<64x1xf32>
    %53 = vector.broadcast %52 : vector<64x1xf32> to vector<64x128xf32>
    %54 = arith.mulf %6, %53 : vector<64x128xf32>
    %55 = tpu.concatenate %9, %12, %15, %18, %21, %24, %27, %30, %33, %36, %39, %42, %45, %48, %51, %54 in 1 : vector<64x128xf32>, vector<64x128xf32>, vector<64x128xf32>, vector<64x128xf32>, vector<64x128xf32>, vector<64x128xf32>, vector<64x128xf32>, vector<64x128xf32>, vector<64x128xf32>, vector<64x128xf32>, vector<64x128xf32>, vector<64x128xf32>, vector<64x128xf32>, vector<64x128xf32>, vector<64x128xf32>, vector<64x128xf32> -> vector<64x2048xf32>
    %c0_4 = arith.constant 0 : index
    %c0_5 = arith.constant 0 : index
    %56 = vector.load %arg3[%c0_4, %c0_5] : memref<2048x128xf32, #tpu.memory_space<vmem>>, vector<2048x128xf32>
    %cst_6 = arith.constant dense<0.000000e+00> : vector<64x128xf32>
    %57 = tpu.matmul %55, %56, %cst_6 {dimension_numbers = #tpu.dot_dimension_numbers<[1], [0], [0], [1], [0, 0, 1, 1], [], []>} : vector<64x2048xf32>, vector<2048x128xf32>, vector<64x128xf32> -> vector<64x128xf32>
    %58 = vector.extract_strided_slice %5 {offsets = [0, 128], sizes = [64, 16], strides = [1, 1]} : vector<64x144xf32> to vector<64x16xf32>
    %c0_7 = arith.constant 0 : index
    %c0_8 = arith.constant 0 : index
    %59 = vector.load %arg4[%c0_7, %c0_8] : memref<16x128xf32, #tpu.memory_space<vmem>>, vector<16x128xf32>
    %cst_9 = arith.constant dense<0.000000e+00> : vector<64x128xf32>
    %60 = tpu.matmul %58, %59, %cst_9 {dimension_numbers = #tpu.dot_dimension_numbers<[1], [0], [0], [1], [0, 0, 1, 1], [], []>} : vector<64x16xf32>, vector<16x128xf32>, vector<64x128xf32> -> vector<64x128xf32>
    %61 = arith.addf %57, %60 : vector<64x128xf32>
    %c0_10 = arith.constant 0 : index
    %c0_11 = arith.constant 0 : index
    %62 = vector.load %arg5[%c0_10, %c0_11] : memref<64x128xf32, #tpu.memory_space<vmem>>, vector<64x128xf32>
    tpu.vector_store %arg5[%c0_10, %c0_11], %61 {strides = array<i32>} : memref<64x128xf32, #tpu.memory_space<vmem>>, vector<64x128xf32>,
    return
  }
  func.func @transform_0(%arg0: i32) -> (i32, i32) {
    %c0_i32 = arith.constant 0 : i32
    %c0_i32_0 = arith.constant 0 : i32
    return %arg0, %c0_i32 : i32, i32
  }
  func.func @transform_1(%arg0: i32) -> (i32, i32) {
    %c0_i32 = arith.constant 0 : i32
    %c0_i32_0 = arith.constant 0 : i32
    %c0_i32_1 = arith.constant 0 : i32
    return %c0_i32, %c0_i32_0 : i32, i32
  }
  func.func @transform_2(%arg0: i32) -> (i32, i32) {
    %c0_i32 = arith.constant 0 : i32
    %c0_i32_0 = arith.constant 0 : i32
    %c0_i32_1 = arith.constant 0 : i32
    return %c0_i32, %c0_i32_0 : i32, i32
  }
  func.func @transform_3(%arg0: i32) -> (i32, i32) {
    %c0_i32 = arith.constant 0 : i32
    %c0_i32_0 = arith.constant 0 : i32
    %c0_i32_1 = arith.constant 0 : i32
    return %c0_i32, %c0_i32_0 : i32, i32
  }
  func.func @transform_4(%arg0: i32) -> (i32, i32) {
    %c0_i32 = arith.constant 0 : i32
    %c0_i32_0 = arith.constant 0 : i32
    return %arg0, %c0_i32 : i32, i32
  }
}

</mosaic_0001>

<llo_original>
// kernel: tpu_custom_call.1
$region0: #{tpu_custom_call.1}
  #allocation0 [shape = 'u32[]', space=smem, size = 0x4, offset = 0x4, fixed_abs, tag = 'smem constant byte address 0x4 - core index']
  #allocation1 [shape = 'u32[144,128]{1,0:T(1,128)}', space=vmem, size = 0x12000, scoped, tag = 'internal scratch']
  %s0 = inlined_call_operand.vmem [shape: f32[64,16], index: 0, kind: input, shape index: {}]
  %s1 = inlined_call_operand.vmem [shape: f32[4,144], index: 1, kind: input, shape index: {}]
  %s2 = inlined_call_operand.hbm [shape: f32[2048,128], index: 2, kind: input, shape index: {}]
  %s3 = inlined_call_operand.vmem [shape: f32[16,128], index: 3, kind: input, shape index: {}]
  %s4 = inlined_call_operand.hbm [shape: f32[64,128], index: 4, kind: output, shape index: {}]
  %s5 = sld [smem:[#allocation0]]
  $region30: #{tpu_custom_call.1} parent=0
    _
  %s7 = ssub.s32 1, %s5
  %s8 = scalar_select 0, %s7, %s5
  $region1: #{tpu_custom_call.1} parent=0
    #allocation2 [shape = 'u8[1048576]{0}', space=vmem, size = 0x100000, scoped, tag = 'input window, operand 2, single buffered']
    #allocation3 [shape = 's32[1]{0}', space=sflag, size = 0x4, scoped, tag = 'scoped memory for tpu_custom_call.1']
    #allocation4 [shape = 's32[1]{0}', space=sflag, size = 0x4, scoped, tag = 'scoped memory for tpu_custom_call.1']
    #allocation5 [shape = 'u8[32768]{0}', space=vmem, size = 0x8000, scoped, tag = 'output window, operand 0, single buffered']
    %9 = vsyncpa [#allocation3], 0
    %10 = vsyncpa [#allocation4], 0
    // Predicated region
    $region2: #{tpu_custom_call.1} parent=1 // pred_check
      _
    $region3: #{tpu_custom_call.1} parent=1 // pred_check_branch
      %12 = sbr.rel (0) target = $region5
    $region4: #{tpu_custom_call.1} parent=1 // pred_region
      _
    $region5: #{tpu_custom_call.1} parent=1 // pred_fallthru
      _
    // Predicated region
    $region6: #{tpu_custom_call.1} parent=1 // pred_check
      _
    $region7: #{tpu_custom_call.1} parent=1 // pred_check_branch
      %14 = sbr.rel (0) target = $region9
    $region8: #{tpu_custom_call.1} parent=1 // pred_region
      _
    $region9: #{tpu_custom_call.1} parent=1 // pred_fallthru
      _
    // Predicated region
    $region10: #{tpu_custom_call.1} parent=1 // pred_check
      _
    $region11: #{tpu_custom_call.1} parent=1 // pred_check_branch
      %16 = sbr.rel (0) target = $region13
    $region12: #{tpu_custom_call.1} parent=1 // pred_region
      %s18 = ssub.s32 32768, 32768
      %19 = vsyncadd [#allocation3], %s18
      %s20 = sshll.u32 [#allocation2], 4
      %s21 = int_to_ptr.vmem [resolvable:$true] %s20
      %26 = dma.hbm_to_vmem [thread:$0]  %s2, 32768, %s21, [#allocation3], 128, 128, 8
    $region13: #{tpu_custom_call.1} parent=1 // pred_fallthru
      _
    // Predicated region
    $region14: #{tpu_custom_call.1} parent=1 // pred_check
      _
    $region15: #{tpu_custom_call.1} parent=1 // pred_check_branch
      %28 = sbr.rel (0) target = $region17
    $region16: #{tpu_custom_call.1} parent=1 // pred_region
      _
    $region17: #{tpu_custom_call.1} parent=1 // pred_fallthru
      _
    // Predicated region
    $region18: #{tpu_custom_call.1} parent=1 // pred_check
      _
    $region19: #{tpu_custom_call.1} parent=1 // pred_check_branch
      %30 = sbr.rel (0) target = $region21
    $region20: #{tpu_custom_call.1} parent=1 // pred_region
      %31 = dma.done [#allocation3], 32768
    $region21: #{tpu_custom_call.1} parent=1 // pred_fallthru
      _
    %v32 = vld [vmem:[%s0] sm:$0xff]
    %v33 = vld [vmem:[%s0 + $0x8] sm:$0xff]
    %v34 = vld [vmem:[%s0 + $0x10] sm:$0xff]
    %v35 = vld [vmem:[%s0 + $0x18] sm:$0xff]
    %v36 = vld [vmem:[%s0 + $0x20] sm:$0xff]
    %v37 = vld [vmem:[%s0 + $0x28] sm:$0xff]
    %v38 = vld [vmem:[%s0 + $0x30] sm:$0xff]
    %v39 = vld [vmem:[%s0 + $0x38] sm:$0xff]
    %v40 = vld [vmem:[%s1] sm:$0xff]
    %v42 = vcombine.high %v40, %v40
    %vm43 = vcmask 31744
    %v45 = vsel %vm43, %v32, 0
    %v48 = vsel %vm43, %v33, 0
    %v51 = vsel %vm43, %v34, 0
    %v54 = vsel %vm43, %v35, 0
    %v57 = vsel %vm43, %v36, 0
    %v60 = vsel %vm43, %v37, 0
    %v63 = vsel %vm43, %v38, 0
    %v66 = vsel %vm43, %v39, 0
    %vm68 = vcmask 1043456
    %v69 = vsel %vm68, %v40, 0
    %v71 = vsel %vm68, %v42, 0
    %73 = vmatprep.subr.mxu0 %v71
    %74 = vmatpush1.msra.mxu0 %v69
    %75 = vmatprep.subr.mxu0 0.0
    %76 = vmatpush1.msra.mxu0 0.0
    %77 = vmatprep.subr.mxu0 0.0
    %78 = vmatpush1.msra.mxu0 0.0
    %79 = vmatprep.subr.mxu0 0.0
    %80 = vmatpush1.msra.mxu0 0.0
    %81 = vmatprep.subr.mxu0 0.0
    %82 = vmatpush1.msra.mxu0 0.0
    %83 = vmatprep.subr.mxu0 0.0
    %84 = vmatpush1.msra.mxu0 0.0
    %85 = vmatprep.subr.mxu0 0.0
    %86 = vmatpush1.msra.mxu0 0.0
    %87 = vmatprep.subr.mxu0 0.0
    %88 = vmatpush1.msra.mxu0 0.0
    %89 = vmatprep.subr.mxu0 0.0
    %90 = vmatpush1.msra.mxu0 0.0
    %91 = vmatprep.subr.mxu0 0.0
    %92 = vmatpush1.msra.mxu0 0.0
    %93 = vmatprep.subr.mxu0 0.0
    %94 = vmatpush1.msra.mxu0 0.0
    %95 = vmatprep.subr.mxu0 0.0
    %96 = vmatpush1.msra.mxu0 0.0
    %97 = vmatprep.subr.mxu0 0.0
    %98 = vmatpush1.msra.mxu0 0.0
    %99 = vmatprep.subr.mxu0 0.0
    %100 = vmatpush1.msra.mxu0 0.0
    %101 = vmatprep.subr.mxu0 0.0
    %102 = vmatpush1.msra.mxu0 0.0
    %103 = vmatprep.subr.mxu0 0.0
    %104 = vmatpush1.msra.mxu0 0.0
    %105 = vmatprep.subr.mxu0 0.0
    %106 = vmatpush1.msra.mxu0 0.0
    %107 = vmatprep.subr.mxu0 0.0
    %108 = vmatpush1.msra.mxu0 0.0
    %109 = vmatprep.subr.mxu0 0.0
    %110 = vmatpush1.msra.mxu0 0.0
    %111 = vmatprep.subr.mxu0 0.0
    %112 = vmatpush1.msra.mxu0 0.0
    %113 = vmatprep.subr.mxu0 0.0
    %114 = vmatpush1.msra.mxu0 0.0
    %115 = vmatprep.subr.mxu0 0.0
    %116 = vmatpush1.msra.mxu0 0.0
    %117 = vmatprep.subr.mxu0 0.0
    %118 = vmatpush1.msra.mxu0 0.0
    %119 = vmatprep.subr.mxu0 0.0
    %120 = vmatpush1.msra.mxu0 0.0
    %121 = vmatprep.subr.mxu0 0.0
    %122 = vmatpush1.msra.mxu0 0.0
    %123 = vmatprep.subr.mxu0 0.0
    %124 = vmatpush1.msra.mxu0 0.0
    %125 = vmatprep.subr.mxu0 0.0
    %126 = vmatpush1.msra.mxu0 0.0
    %127 = vmatprep.subr.mxu0 0.0
    %128 = vmatpush1.msra.mxu0 0.0
    %129 = vmatprep.subr.mxu0 0.0
    %130 = vmatpush1.msra.mxu0 0.0
    %131 = vmatprep.subr.mxu0 0.0
    %132 = vmatpush1.msra.mxu0 0.0
    %133 = vmatprep.subr.mxu0 0.0
    %134 = vmatpush1.msra.mxu0 0.0
    %135 = vmatprep.subr.mxu0 0.0
    %136 = vmatpush1.msra.mxu0 0.0
    %137 = vmatprep.mubr.f32.mxu0 0.0
    %138 = vmatmul.mubr.f32.gmra.mrb[0].mxu0 %v45
    %v139 = vpop.f32.mrb[0].mxu0
    %v140 = vadd.f32 0.0, %v139
    %v141 = vpop.f32.mrb[0].mxu0
    %v142 = vadd.f32 0.0, %v141
    %143 = vmatprep.mubr.f32.mxu0 0.0
    %144 = vmatmul.mubr.f32.gmra.mrb[0].mxu0 %v48
    %v145 = vpop.f32.mrb[0].mxu0
    %v146 = vadd.f32 0.0, %v145
    %v147 = vpop.f32.mrb[0].mxu0
    %v148 = vadd.f32 0.0, %v147
    %149 = vmatprep.mubr.f32.mxu0 0.0
    %150 = vmatmul.mubr.f32.gmra.mrb[0].mxu0 %v51
    %v151 = vpop.f32.mrb[0].mxu0
    %v152 = vadd.f32 0.0, %v151
    %v153 = vpop.f32.mrb[0].mxu0
    %v154 = vadd.f32 0.0, %v153
    %155 = vmatprep.mubr.f32.mxu0 0.0
    %156 = vmatmul.mubr.f32.gmra.mrb[0].mxu0 %v54
    %v157 = vpop.f32.mrb[0].mxu0
    %v158 = vadd.f32 0.0, %v157
    %v159 = vpop.f32.mrb[0].mxu0
    %v160 = vadd.f32 0.0, %v159
    %161 = vmatprep.mubr.f32.mxu0 0.0
    %162 = vmatmul.mubr.f32.gmra.mrb[0].mxu0 %v57
    %v163 = vpop.f32.mrb[0].mxu0
    %v164 = vadd.f32 0.0, %v163
    %v165 = vpop.f32.mrb[0].mxu0
    %v166 = vadd.f32 0.0, %v165
    %167 = vmatprep.mubr.f32.mxu0 0.0
    %168 = vmatmul.mubr.f32.gmra.mrb[0].mxu0 %v60
    %v169 = vpop.f32.mrb[0].mxu0
    %v170 = vadd.f32 0.0, %v169
    %v171 = vpop.f32.mrb[0].mxu0
    %v172 = vadd.f32 0.0, %v171
    %173 = vmatprep.mubr.f32.mxu0 0.0
    %174 = vmatmul.mubr.f32.gmra.mrb[0].mxu0 %v63
    %v175 = vpop.f32.mrb[0].mxu0
    %v176 = vadd.f32 0.0, %v175
    %v177 = vpop.f32.mrb[0].mxu0
    %v178 = vadd.f32 0.0, %v177
    %179 = vmatprep.mubr.f32.mxu0 0.0
    %180 = vmatmul.mubr.f32.gmra.mrb[0].mxu0 %v66
    %v181 = vpop.f32.mrb[0].mxu0
    %v182 = vadd.f32 0.0, %v181
    %v183 = vpop.f32.mrb[0].mxu0
    %v184 = vadd.f32 0.0, %v183
    %185 = vdwg.mxu0
    %v186 = vmul.f32 %v140, 0.5
    %v187 = vmul.f32 %v142, 0.5
    %v188 = vmul.f32 %v146, 0.5
    %v189 = vmul.f32 %v148, 0.5
    %v190 = vmul.f32 %v152, 0.5
    %v191 = vmul.f32 %v154, 0.5
    %v192 = vmul.f32 %v158, 0.5
    %v193 = vmul.f32 %v160, 0.5
    %v194 = vmul.f32 %v164, 0.5
    %v195 = vmul.f32 %v166, 0.5
    %v196 = vmul.f32 %v170, 0.5
    %v197 = vmul.f32 %v172, 0.5
    %v198 = vmul.f32 %v176, 0.5
    %v199 = vmul.f32 %v178, 0.5
    %v200 = vmul.f32 %v182, 0.5
    %v201 = vmul.f32 %v184, 0.5
    %202 = vset.pattern.permute.xlu0 0
    %203 = vperm.xlu0 %202, %v32
    %v204 = vpop.permute.xlu0 %203
    %206 = vset.pattern.permute.xlu0 0
    %207 = vperm.xlu0 %206, %v33
    %v208 = vpop.permute.xlu0 %207
    %210 = vset.pattern.permute.xlu0 0
    %211 = vperm.xlu0 %210, %v34
    %v212 = vpop.permute.xlu0 %211
    %214 = vset.pattern.permute.xlu0 0
    %215 = vperm.xlu0 %214, %v35
    %v216 = vpop.permute.xlu0 %215
    %218 = vset.pattern.permute.xlu0 0
    %219 = vperm.xlu0 %218, %v36
    %v220 = vpop.permute.xlu0 %219
    %222 = vset.pattern.permute.xlu0 0
    %223 = vperm.xlu0 %222, %v37
    %v224 = vpop.permute.xlu0 %223
    %226 = vset.pattern.permute.xlu0 0
    %227 = vperm.xlu0 %226, %v38
    %v228 = vpop.permute.xlu0 %227
    %230 = vset.pattern.permute.xlu0 0
    %231 = vperm.xlu0 %230, %v39
    %v232 = vpop.permute.xlu0 %231
    %v234 = vmul.f32 %v186, %v204
    %v235 = vmul.f32 %v188, %v208
    %v236 = vmul.f32 %v190, %v212
    %v237 = vmul.f32 %v192, %v216
    %v238 = vmul.f32 %v194, %v220
    %v239 = vmul.f32 %v196, %v224
    %v240 = vmul.f32 %v198, %v228
    %v241 = vmul.f32 %v200, %v232
    %242 = vset.pattern.permute.xlu0 1
    %243 = vperm.xlu0 %242, %v32
    %v244 = vpop.permute.xlu0 %243
    %246 = vset.pattern.permute.xlu0 1
    %247 = vperm.xlu0 %246, %v33
    %v248 = vpop.permute.xlu0 %247
    %250 = vset.pattern.permute.xlu0 1
    %251 = vperm.xlu0 %250, %v34
    %v252 = vpop.permute.xlu0 %251
    %254 = vset.pattern.permute.xlu0 1
    %255 = vperm.xlu0 %254, %v35
    %v256 = vpop.permute.xlu0 %255
    %258 = vset.pattern.permute.xlu0 1
    %259 = vperm.xlu0 %258, %v36
    %v260 = vpop.permute.xlu0 %259
    %262 = vset.pattern.permute.xlu0 1
    %263 = vperm.xlu0 %262, %v37
    %v264 = vpop.permute.xlu0 %263
    %266 = vset.pattern.permute.xlu0 1
    %267 = vperm.xlu0 %266, %v38
    %v268 = vpop.permute.xlu0 %267
    %270 = vset.pattern.permute.xlu0 1
    %271 = vperm.xlu0 %270, %v39
    %v272 = vpop.permute.xlu0 %271
    %v274 = vmul.f32 %v186, %v244
    %v275 = vmul.f32 %v188, %v248
    %v276 = vmul.f32 %v190, %v252
    %v277 = vmul.f32 %v192, %v256
    %v278 = vmul.f32 %v194, %v260
    %v279 = vmul.f32 %v196, %v264
    %v280 = vmul.f32 %v198, %v268
    %v281 = vmul.f32 %v200, %v272
    %282 = vset.pattern.permute.xlu0 2
    %283 = vperm.xlu0 %282, %v32
    %v284 = vpop.permute.xlu0 %283
    %286 = vset.pattern.permute.xlu0 2
    %287 = vperm.xlu0 %286, %v33
    %v288 = vpop.permute.xlu0 %287
    %290 = vset.pattern.permute.xlu0 2
    %291 = vperm.xlu0 %290, %v34
    %v292 = vpop.permute.xlu0 %291
    %294 = vset.pattern.permute.xlu0 2
    %295 = vperm.xlu0 %294, %v35
    %v296 = vpop.permute.xlu0 %295
    %298 = vset.pattern.permute.xlu0 2
    %299 = vperm.xlu0 %298, %v36
    %v300 = vpop.permute.xlu0 %299
    %302 = vset.pattern.permute.xlu0 2
    %303 = vperm.xlu0 %302, %v37
    %v304 = vpop.permute.xlu0 %303
    %306 = vset.pattern.permute.xlu0 2
    %307 = vperm.xlu0 %306, %v38
    %v308 = vpop.permute.xlu0 %307
    %310 = vset.pattern.permute.xlu0 2
    %311 = vperm.xlu0 %310, %v39
    %v312 = vpop.permute.xlu0 %311
    %v314 = vmul.f32 %v186, %v284
    %v315 = vmul.f32 %v188, %v288
    %v316 = vmul.f32 %v190, %v292
    %v317 = vmul.f32 %v192, %v296
    %v318 = vmul.f32 %v194, %v300
    %v319 = vmul.f32 %v196, %v304
    %v320 = vmul.f32 %v198, %v308
    %v321 = vmul.f32 %v200, %v312
    %322 = vset.pattern.permute.xlu0 3
    %323 = vperm.xlu0 %322, %v32
    %v324 = vpop.permute.xlu0 %323
    %326 = vset.pattern.permute.xlu0 3
    %327 = vperm.xlu0 %326, %v33
    %v328 = vpop.permute.xlu0 %327
    %330 = vset.pattern.permute.xlu0 3
    %331 = vperm.xlu0 %330, %v34
    %v332 = vpop.permute.xlu0 %331
    %334 = vset.pattern.permute.xlu0 3
    %335 = vperm.xlu0 %334, %v35
    %v336 = vpop.permute.xlu0 %335
    %338 = vset.pattern.permute.xlu0 3
    %339 = vperm.xlu0 %338, %v36
    %v340 = vpop.permute.xlu0 %339
    %342 = vset.pattern.permute.xlu0 3
    %343 = vperm.xlu0 %342, %v37
    %v344 = vpop.permute.xlu0 %343
    %346 = vset.pattern.permute.xlu0 3
    %347 = vperm.xlu0 %346, %v38
    %v348 = vpop.permute.xlu0 %347
    %350 = vset.pattern.permute.xlu0 3
    %351 = vperm.xlu0 %350, %v39
    %v352 = vpop.permute.xlu0 %351
    %v354 = vmul.f32 %v186, %v324
    %v355 = vmul.f32 %v188, %v328
    %v356 = vmul.f32 %v190, %v332
    %v357 = vmul.f32 %v192, %v336
    %v358 = vmul.f32 %v194, %v340
    %v359 = vmul.f32 %v196, %v344
    %v360 = vmul.f32 %v198, %v348
    %v361 = vmul.f32 %v200, %v352
    %362 = vset.pattern.permute.xlu0 4
    %363 = vperm.xlu0 %362, %v32
    %v364 = vpop.permute.xlu0 %363
    %366 = vset.pattern.permute.xlu0 4
    %367 = vperm.xlu0 %366, %v33
    %v368 = vpop.permute.xlu0 %367
    %370 = vset.pattern.permute.xlu0 4
    %371 = vperm.xlu0 %370, %v34
    %v372 = vpop.permute.xlu0 %371
    %374 = vset.pattern.permute.xlu0 4
    %375 = vperm.xlu0 %374, %v35
    %v376 = vpop.permute.xlu0 %375
    %378 = vset.pattern.permute.xlu0 4
    %379 = vperm.xlu0 %378, %v36
    %v380 = vpop.permute.xlu0 %379
    %382 = vset.pattern.permute.xlu0 4
    %383 = vperm.xlu0 %382, %v37
    %v384 = vpop.permute.xlu0 %383
    %386 = vset.pattern.permute.xlu0 4
    %387 = vperm.xlu0 %386, %v38
    %v388 = vpop.permute.xlu0 %387
    %390 = vset.pattern.permute.xlu0 4
    %391 = vperm.xlu0 %390, %v39
    %v392 = vpop.permute.xlu0 %391
    %v394 = vmul.f32 %v186, %v364
    %v395 = vmul.f32 %v188, %v368
    %v396 = vmul.f32 %v190, %v372
    %v397 = vmul.f32 %v192, %v376
    %v398 = vmul.f32 %v194, %v380
    %v399 = vmul.f32 %v196, %v384
    %v400 = vmul.f32 %v198, %v388
    %v401 = vmul.f32 %v200, %v392
    %402 = vset.pattern.permute.xlu0 5
    %403 = vperm.xlu0 %402, %v32
    %v404 = vpop.permute.xlu0 %403
    %406 = vset.pattern.permute.xlu0 5
    %407 = vperm.xlu0 %406, %v33
    %v408 = vpop.permute.xlu0 %407
    %410 = vset.pattern.permute.xlu0 5
    %411 = vperm.xlu0 %410, %v34
    %v412 = vpop.permute.xlu0 %411
    %414 = vset.pattern.permute.xlu0 5
    %415 = vperm.xlu0 %414, %v35
    %v416 = vpop.permute.xlu0 %415
    %418 = vset.pattern.permute.xlu0 5
    %419 = vperm.xlu0 %418, %v36
    %v420 = vpop.permute.xlu0 %419
    %422 = vset.pattern.permute.xlu0 5
    %423 = vperm.xlu0 %422, %v37
    %v424 = vpop.permute.xlu0 %423
    %426 = vset.pattern.permute.xlu0 5
    %427 = vperm.xlu0 %426, %v38
    %v428 = vpop.permute.xlu0 %427
    %430 = vset.pattern.permute.xlu0 5
    %431 = vperm.xlu0 %430, %v39
    %v432 = vpop.permute.xlu0 %431
    %v434 = vmul.f32 %v186, %v404
    %v435 = vmul.f32 %v188, %v408
    %v436 = vmul.f32 %v190, %v412
    %v437 = vmul.f32 %v192, %v416
    %v438 = vmul.f32 %v194, %v420
    %v439 = vmul.f32 %v196, %v424
    %v440 = vmul.f32 %v198, %v428
    %v441 = vmul.f32 %v200, %v432
    %442 = vset.pattern.permute.xlu0 6
    %443 = vperm.xlu0 %442, %v32
    %v444 = vpop.permute.xlu0 %443
    %446 = vset.pattern.permute.xlu0 6
    %447 = vperm.xlu0 %446, %v33
    %v448 = vpop.permute.xlu0 %447
    %450 = vset.pattern.permute.xlu0 6
    %451 = vperm.xlu0 %450, %v34
    %v452 = vpop.permute.xlu0 %451
    %454 = vset.pattern.permute.xlu0 6
    %455 = vperm.xlu0 %454, %v35
    %v456 = vpop.permute.xlu0 %455
    %458 = vset.pattern.permute.xlu0 6
    %459 = vperm.xlu0 %458, %v36
    %v460 = vpop.permute.xlu0 %459
    %462 = vset.pattern.permute.xlu0 6
    %463 = vperm.xlu0 %462, %v37
    %v464 = vpop.permute.xlu0 %463
    %466 = vset.pattern.permute.xlu0 6
    %467 = vperm.xlu0 %466, %v38
    %v468 = vpop.permute.xlu0 %467
    %470 = vset.pattern.permute.xlu0 6
    %471 = vperm.xlu0 %470, %v39
    %v472 = vpop.permute.xlu0 %471
    %v474 = vmul.f32 %v186, %v444
    %v475 = vmul.f32 %v188, %v448
    %v476 = vmul.f32 %v190, %v452
    %v477 = vmul.f32 %v192, %v456
    %v478 = vmul.f32 %v194, %v460
    %v479 = vmul.f32 %v196, %v464
    %v480 = vmul.f32 %v198, %v468
    %v481 = vmul.f32 %v200, %v472
    %482 = vset.pattern.permute.xlu0 7
    %483 = vperm.xlu0 %482, %v32
    %v484 = vpop.permute.xlu0 %483
    %486 = vset.pattern.permute.xlu0 7
    %487 = vperm.xlu0 %486, %v33
    %v488 = vpop.permute.xlu0 %487
    %490 = vset.pattern.permute.xlu0 7
    %491 = vperm.xlu0 %490, %v34
    %v492 = vpop.permute.xlu0 %491
    %494 = vset.pattern.permute.xlu0 7
    %495 = vperm.xlu0 %494, %v35
    %v496 = vpop.permute.xlu0 %495
    %498 = vset.pattern.permute.xlu0 7
    %499 = vperm.xlu0 %498, %v36
    %v500 = vpop.permute.xlu0 %499
    %502 = vset.pattern.permute.xlu0 7
    %503 = vperm.xlu0 %502, %v37
    %v504 = vpop.permute.xlu0 %503
    %506 = vset.pattern.permute.xlu0 7
    %507 = vperm.xlu0 %506, %v38
    %v508 = vpop.permute.xlu0 %507
    %510 = vset.pattern.permute.xlu0 7
    %511 = vperm.xlu0 %510, %v39
    %v512 = vpop.permute.xlu0 %511
    %v514 = vmul.f32 %v186, %v484
    %v515 = vmul.f32 %v188, %v488
    %v516 = vmul.f32 %v190, %v492
    %v517 = vmul.f32 %v192, %v496
    %v518 = vmul.f32 %v194, %v500
    %v519 = vmul.f32 %v196, %v504
    %v520 = vmul.f32 %v198, %v508
    %v521 = vmul.f32 %v200, %v512
    %522 = vset.pattern.permute.xlu0 8
    %523 = vperm.xlu0 %522, %v32
    %v524 = vpop.permute.xlu0 %523
    %526 = vset.pattern.permute.xlu0 8
    %527 = vperm.xlu0 %526, %v33
    %v528 = vpop.permute.xlu0 %527
    %530 = vset.pattern.permute.xlu0 8
    %531 = vperm.xlu0 %530, %v34
    %v532 = vpop.permute.xlu0 %531
    %534 = vset.pattern.permute.xlu0 8
    %535 = vperm.xlu0 %534, %v35
    %v536 = vpop.permute.xlu0 %535
    %538 = vset.pattern.permute.xlu0 8
    %539 = vperm.xlu0 %538, %v36
    %v540 = vpop.permute.xlu0 %539
    %542 = vset.pattern.permute.xlu0 8
    %543 = vperm.xlu0 %542, %v37
    %v544 = vpop.permute.xlu0 %543
    %546 = vset.pattern.permute.xlu0 8
    %547 = vperm.xlu0 %546, %v38
    %v548 = vpop.permute.xlu0 %547
    %550 = vset.pattern.permute.xlu0 8
    %551 = vperm.xlu0 %550, %v39
    %v552 = vpop.permute.xlu0 %551
    %v554 = vmul.f32 %v186, %v524
    %v555 = vmul.f32 %v188, %v528
    %v556 = vmul.f32 %v190, %v532
    %v557 = vmul.f32 %v192, %v536
    %v558 = vmul.f32 %v194, %v540
    %v559 = vmul.f32 %v196, %v544
    %v560 = vmul.f32 %v198, %v548
    %v561 = vmul.f32 %v200, %v552
    %562 = vset.pattern.permute.xlu0 9
    %563 = vperm.xlu0 %562, %v32
    %v564 = vpop.permute.xlu0 %563
    %566 = vset.pattern.permute.xlu0 9
    %567 = vperm.xlu0 %566, %v33
    %v568 = vpop.permute.xlu0 %567
    %570 = vset.pattern.permute.xlu0 9
    %571 = vperm.xlu0 %570, %v34
    %v572 = vpop.permute.xlu0 %571
    %574 = vset.pattern.permute.xlu0 9
    %575 = vperm.xlu0 %574, %v35
    %v576 = vpop.permute.xlu0 %575
    %578 = vset.pattern.permute.xlu0 9
    %579 = vperm.xlu0 %578, %v36
    %v580 = vpop.permute.xlu0 %579
    %582 = vset.pattern.permute.xlu0 9
    %583 = vperm.xlu0 %582, %v37
    %v584 = vpop.permute.xlu0 %583
    %586 = vset.pattern.permute.xlu0 9
    %587 = vperm.xlu0 %586, %v38
    %v588 = vpop.permute.xlu0 %587
    %590 = vset.pattern.permute.xlu0 9
    %591 = vperm.xlu0 %590, %v39
    %v592 = vpop.permute.xlu0 %591
    %v594 = vmul.f32 %v186, %v564
    %v595 = vmul.f32 %v188, %v568
    %v596 = vmul.f32 %v190, %v572
    %v597 = vmul.f32 %v192, %v576
    %v598 = vmul.f32 %v194, %v580
    %v599 = vmul.f32 %v196, %v584
    %v600 = vmul.f32 %v198, %v588
    %v601 = vmul.f32 %v200, %v592
    %602 = vset.pattern.permute.xlu0 10
    %603 = vperm.xlu0 %602, %v32
    %v604 = vpop.permute.xlu0 %603
    %606 = vset.pattern.permute.xlu0 10
    %607 = vperm.xlu0 %606, %v33
    %v608 = vpop.permute.xlu0 %607
    %610 = vset.pattern.permute.xlu0 10
    %611 = vperm.xlu0 %610, %v34
    %v612 = vpop.permute.xlu0 %611
    %614 = vset.pattern.permute.xlu0 10
    %615 = vperm.xlu0 %614, %v35
    %v616 = vpop.permute.xlu0 %615
    %618 = vset.pattern.permute.xlu0 10
    %619 = vperm.xlu0 %618, %v36
    %v620 = vpop.permute.xlu0 %619
    %622 = vset.pattern.permute.xlu0 10
    %623 = vperm.xlu0 %622, %v37
    %v624 = vpop.permute.xlu0 %623
    %626 = vset.pattern.permute.xlu0 10
    %627 = vperm.xlu0 %626, %v38
    %v628 = vpop.permute.xlu0 %627
    %630 = vset.pattern.permute.xlu0 10
    %631 = vperm.xlu0 %630, %v39
    %v632 = vpop.permute.xlu0 %631
    %v634 = vmul.f32 %v186, %v604
    %v635 = vmul.f32 %v188, %v608
    %v636 = vmul.f32 %v190, %v612
    %v637 = vmul.f32 %v192, %v616
    %v638 = vmul.f32 %v194, %v620
    %v639 = vmul.f32 %v196, %v624
    %v640 = vmul.f32 %v198, %v628
    %v641 = vmul.f32 %v200, %v632
    %642 = vset.pattern.permute.xlu0 11
    %643 = vperm.xlu0 %642, %v32
    %v644 = vpop.permute.xlu0 %643
    %646 = vset.pattern.permute.xlu0 11
    %647 = vperm.xlu0 %646, %v33
    %v648 = vpop.permute.xlu0 %647
    %650 = vset.pattern.permute.xlu0 11
    %651 = vperm.xlu0 %650, %v34
    %v652 = vpop.permute.xlu0 %651
    %654 = vset.pattern.permute.xlu0 11
    %655 = vperm.xlu0 %654, %v35
    %v656 = vpop.permute.xlu0 %655
    %658 = vset.pattern.permute.xlu0 11
    %659 = vperm.xlu0 %658, %v36
    %v660 = vpop.permute.xlu0 %659
    %662 = vset.pattern.permute.xlu0 11
    %663 = vperm.xlu0 %662, %v37
    %v664 = vpop.permute.xlu0 %663
    %666 = vset.pattern.permute.xlu0 11
    %667 = vperm.xlu0 %666, %v38
    %v668 = vpop.permute.xlu0 %667
    %670 = vset.pattern.permute.xlu0 11
    %671 = vperm.xlu0 %670, %v39
    %v672 = vpop.permute.xlu0 %671
    %v674 = vmul.f32 %v186, %v644
    %v675 = vmul.f32 %v188, %v648
    %v676 = vmul.f32 %v190, %v652
    %v677 = vmul.f32 %v192, %v656
    %v678 = vmul.f32 %v194, %v660
    %v679 = vmul.f32 %v196, %v664
    %v680 = vmul.f32 %v198, %v668
    %v681 = vmul.f32 %v200, %v672
    %682 = vset.pattern.permute.xlu0 12
    %683 = vperm.xlu0 %682, %v32
    %v684 = vpop.permute.xlu0 %683
    %686 = vset.pattern.permute.xlu0 12
    %687 = vperm.xlu0 %686, %v33
    %v688 = vpop.permute.xlu0 %687
    %690 = vset.pattern.permute.xlu0 12
    %691 = vperm.xlu0 %690, %v34
    %v692 = vpop.permute.xlu0 %691
    %694 = vset.pattern.permute.xlu0 12
    %695 = vperm.xlu0 %694, %v35
    %v696 = vpop.permute.xlu0 %695
    %698 = vset.pattern.permute.xlu0 12
    %699 = vperm.xlu0 %698, %v36
    %v700 = vpop.permute.xlu0 %699
    %702 = vset.pattern.permute.xlu0 12
    %703 = vperm.xlu0 %702, %v37
    %v704 = vpop.permute.xlu0 %703
    %706 = vset.pattern.permute.xlu0 12
    %707 = vperm.xlu0 %706, %v38
    %v708 = vpop.permute.xlu0 %707
    %710 = vset.pattern.permute.xlu0 12
    %711 = vperm.xlu0 %710, %v39
    %v712 = vpop.permute.xlu0 %711
    %v714 = vmul.f32 %v186, %v684
    %v715 = vmul.f32 %v188, %v688
    %v716 = vmul.f32 %v190, %v692
    %v717 = vmul.f32 %v192, %v696
    %v718 = vmul.f32 %v194, %v700
    %v719 = vmul.f32 %v196, %v704
    %v720 = vmul.f32 %v198, %v708
    %v721 = vmul.f32 %v200, %v712
    %722 = vset.pattern.permute.xlu0 13
    %723 = vperm.xlu0 %722, %v32
    %v724 = vpop.permute.xlu0 %723
    %726 = vset.pattern.permute.xlu0 13
    %727 = vperm.xlu0 %726, %v33
    %v728 = vpop.permute.xlu0 %727
    %730 = vset.pattern.permute.xlu0 13
    %731 = vperm.xlu0 %730, %v34
    %v732 = vpop.permute.xlu0 %731
    %734 = vset.pattern.permute.xlu0 13
    %735 = vperm.xlu0 %734, %v35
    %v736 = vpop.permute.xlu0 %735
    %738 = vset.pattern.permute.xlu0 13
    %739 = vperm.xlu0 %738, %v36
    %v740 = vpop.permute.xlu0 %739
    %742 = vset.pattern.permute.xlu0 13
    %743 = vperm.xlu0 %742, %v37
    %v744 = vpop.permute.xlu0 %743
    %746 = vset.pattern.permute.xlu0 13
    %747 = vperm.xlu0 %746, %v38
    %v748 = vpop.permute.xlu0 %747
    %750 = vset.pattern.permute.xlu0 13
    %751 = vperm.xlu0 %750, %v39
    %v752 = vpop.permute.xlu0 %751
    %v754 = vmul.f32 %v186, %v724
    %v755 = vmul.f32 %v188, %v728
    %v756 = vmul.f32 %v190, %v732
    %v757 = vmul.f32 %v192, %v736
    %v758 = vmul.f32 %v194, %v740
    %v759 = vmul.f32 %v196, %v744
    %v760 = vmul.f32 %v198, %v748
    %v761 = vmul.f32 %v200, %v752
    %762 = vset.pattern.permute.xlu0 14
    %763 = vperm.xlu0 %762, %v32
    %v764 = vpop.permute.xlu0 %763
    %766 = vset.pattern.permute.xlu0 14
    %767 = vperm.xlu0 %766, %v33
    %v768 = vpop.permute.xlu0 %767
    %770 = vset.pattern.permute.xlu0 14
    %771 = vperm.xlu0 %770, %v34
    %v772 = vpop.permute.xlu0 %771
    %774 = vset.pattern.permute.xlu0 14
    %775 = vperm.xlu0 %774, %v35
    %v776 = vpop.permute.xlu0 %775
    %778 = vset.pattern.permute.xlu0 14
    %779 = vperm.xlu0 %778, %v36
    %v780 = vpop.permute.xlu0 %779
    %782 = vset.pattern.permute.xlu0 14
    %783 = vperm.xlu0 %782, %v37
    %v784 = vpop.permute.xlu0 %783
    %786 = vset.pattern.permute.xlu0 14
    %787 = vperm.xlu0 %786, %v38
    %v788 = vpop.permute.xlu0 %787
    %790 = vset.pattern.permute.xlu0 14
    %791 = vperm.xlu0 %790, %v39
    %v792 = vpop.permute.xlu0 %791
    %v794 = vmul.f32 %v186, %v764
    %v795 = vmul.f32 %v188, %v768
    %v796 = vmul.f32 %v190, %v772
    %v797 = vmul.f32 %v192, %v776
    %v798 = vmul.f32 %v194, %v780
    %v799 = vmul.f32 %v196, %v784
    %v800 = vmul.f32 %v198, %v788
    %v801 = vmul.f32 %v200, %v792
    %802 = vset.pattern.permute.xlu0 15
    %803 = vperm.xlu0 %802, %v32
    %v804 = vpop.permute.xlu0 %803
    %806 = vset.pattern.permute.xlu0 15
    %807 = vperm.xlu0 %806, %v33
    %v808 = vpop.permute.xlu0 %807
    %810 = vset.pattern.permute.xlu0 15
    %811 = vperm.xlu0 %810, %v34
    %v812 = vpop.permute.xlu0 %811
    %814 = vset.pattern.permute.xlu0 15
    %815 = vperm.xlu0 %814, %v35
    %v816 = vpop.permute.xlu0 %815
    %818 = vset.pattern.permute.xlu0 15
    %819 = vperm.xlu0 %818, %v36
    %v820 = vpop.permute.xlu0 %819
    %822 = vset.pattern.permute.xlu0 15
    %823 = vperm.xlu0 %822, %v37
    %v824 = vpop.permute.xlu0 %823
    %826 = vset.pattern.permute.xlu0 15
    %827 = vperm.xlu0 %826, %v38
    %v828 = vpop.permute.xlu0 %827
    %830 = vset.pattern.permute.xlu0 15
    %831 = vperm.xlu0 %830, %v39
    %v832 = vpop.permute.xlu0 %831
    %v834 = vmul.f32 %v186, %v804
    %v835 = vmul.f32 %v188, %v808
    %v836 = vmul.f32 %v190, %v812
    %v837 = vmul.f32 %v192, %v816
    %v838 = vmul.f32 %v194, %v820
    %v839 = vmul.f32 %v196, %v824
    %v840 = vmul.f32 %v198, %v828
    %v841 = vmul.f32 %v200, %v832
    %v842 = vld [vmem:[#allocation2] sm:$0xff]
    %v843 = vld [vmem:[#allocation2 + $0x8] sm:$0xff]
    %v844 = vld [vmem:[#allocation2 + $0x10] sm:$0xff]
    %v845 = vld [vmem:[#allocation2 + $0x18] sm:$0xff]
    %v846 = vld [vmem:[#allocation2 + $0x20] sm:$0xff]
    %v847 = vld [vmem:[#allocation2 + $0x28] sm:$0xff]
    %v848 = vld [vmem:[#allocation2 + $0x30] sm:$0xff]
    %v849 = vld [vmem:[#allocation2 + $0x38] sm:$0xff]
    %v850 = vld [vmem:[#allocation2 + $0x40] sm:$0xff]
    %v851 = vld [vmem:[#allocation2 + $0x48] sm:$0xff]
    %v852 = vld [vmem:[#allocation2 + $0x50] sm:$0xff]
    %v853 = vld [vmem:[#allocation2 + $0x58] sm:$0xff]
    %v854 = vld [vmem:[#allocation2 + $0x60] sm:$0xff]
    %v855 = vld [vmem:[#allocation2 + $0x68] sm:$0xff]
    %v856 = vld [vmem:[#allocation2 + $0x70] sm:$0xff]
    %v857 = vld [vmem:[#allocation2 + $0x78] sm:$0xff]
    %v858 = vld [vmem:[#allocation2 + $0x80] sm:$0xff]
    %v859 = vld [vmem:[#allocation2 + $0x88] sm:$0xff]
    %v860 = vld [vmem:[#allocation2 + $0x90] sm:$0xff]
    %v861 = vld [vmem:[#allocation2 + $0x98] sm:$0xff]
    %v862 = vld [vmem:[#allocation2 + $0xa0] sm:$0xff]
    %v863 = vld [vmem:[#allocation2 + $0xa8] sm:$0xff]
    %v864 = vld [vmem:[#allocation2 + $0xb0] sm:$0xff]
    %v865 = vld [vmem:[#allocation2 + $0xb8] sm:$0xff]
    %v866 = vld [vmem:[#allocation2 + $0xc0] sm:$0xff]
    %v867 = vld [vmem:[#allocation2 + $0xc8] sm:$0xff]
    %v868 = vld [vmem:[#allocation2 + $0xd0] sm:$0xff]
    %v869 = vld [vmem:[#allocation2 + $0xd8] sm:$0xff]
    %v870 = vld [vmem:[#allocation2 + $0xe0] sm:$0xff]
    %v871 = vld [vmem:[#allocation2 + $0xe8] sm:$0xff]
    %v872 = vld [vmem:[#allocation2 + $0xf0] sm:$0xff]
    %v873 = vld [vmem:[#allocation2 + $0xf8] sm:$0xff]
    %v874 = vld [vmem:[#allocation2 + $0x100] sm:$0xff]
    %v875 = vld [vmem:[#allocation2 + $0x108] sm:$0xff]
    %v876 = vld [vmem:[#allocation2 + $0x110] sm:$0xff]
    %v877 = vld [vmem:[#allocation2 + $0x118] sm:$0xff]
    %v878 = vld [vmem:[#allocation2 + $0x120] sm:$0xff]
    %v879 = vld [vmem:[#allocation2 + $0x128] sm:$0xff]
    %v880 = vld [vmem:[#allocation2 + $0x130] sm:$0xff]
    %v881 = vld [vmem:[#allocation2 + $0x138] sm:$0xff]
    %v882 = vld [vmem:[#allocation2 + $0x140] sm:$0xff]
    %v883 = vld [vmem:[#allocation2 + $0x148] sm:$0xff]
    %v884 = vld [vmem:[#allocation2 + $0x150] sm:$0xff]
    %v885 = vld [vmem:[#allocation2 + $0x158] sm:$0xff]
    %v886 = vld [vmem:[#allocation2 + $0x160] sm:$0xff]
    %v887 = vld [vmem:[#allocation2 + $0x168] sm:$0xff]
    %v888 = vld [vmem:[#allocation2 + $0x170] sm:$0xff]
    %v889 = vld [vmem:[#allocation2 + $0x178] sm:$0xff]
    %v890 = vld [vmem:[#allocation2 + $0x180] sm:$0xff]
    %v891 = vld [vmem:[#allocation2 + $0x188] sm:$0xff]
    %v892 = vld [vmem:[#allocation2 + $0x190] sm:$0xff]
    %v893 = vld [vmem:[#allocation2 + $0x198] sm:$0xff]
    %v894 = vld [vmem:[#allocation2 + $0x1a0] sm:$0xff]
    %v895 = vld [vmem:[#allocation2 + $0x1a8] sm:$0xff]
    %v896 = vld [vmem:[#allocation2 + $0x1b0] sm:$0xff]
    %v897 = vld [vmem:[#allocation2 + $0x1b8] sm:$0xff]
    %v898 = vld [vmem:[#allocation2 + $0x1c0] sm:$0xff]
    %v899 = vld [vmem:[#allocation2 + $0x1c8] sm:$0xff]
    %v900 = vld [vmem:[#allocation2 + $0x1d0] sm:$0xff]
    %v901 = vld [vmem:[#allocation2 + $0x1d8] sm:$0xff]
    %v902 = vld [vmem:[#allocation2 + $0x1e0] sm:$0xff]
    %v903 = vld [vmem:[#allocation2 + $0x1e8] sm:$0xff]
    %v904 = vld [vmem:[#allocation2 + $0x1f0] sm:$0xff]
    %v905 = vld [vmem:[#allocation2 + $0x1f8] sm:$0xff]
    %v906 = vld [vmem:[#allocation2 + $0x200] sm:$0xff]
    %v907 = vld [vmem:[#allocation2 + $0x208] sm:$0xff]
    %v908 = vld [vmem:[#allocation2 + $0x210] sm:$0xff]
    %v909 = vld [vmem:[#allocation2 + $0x218] sm:$0xff]
    %v910 = vld [vmem:[#allocation2 + $0x220] sm:$0xff]
    %v911 = vld [vmem:[#allocation2 + $0x228] sm:$0xff]
    %v912 = vld [vmem:[#allocation2 + $0x230] sm:$0xff]
    %v913 = vld [vmem:[#allocation2 + $0x238] sm:$0xff]
    %v914 = vld [vmem:[#allocation2 + $0x240] sm:$0xff]
    %v915 = vld [vmem:[#allocation2 + $0x248] sm:$0xff]
    %v916 = vld [vmem:[#allocation2 + $0x250] sm:$0xff]
    %v917 = vld [vmem:[#allocation2 + $0x258] sm:$0xff]
    %v918 = vld [vmem:[#allocation2 + $0x260] sm:$0xff]
    %v919 = vld [vmem:[#allocation2 + $0x268] sm:$0xff]
    %v920 = vld [vmem:[#allocation2 + $0x270] sm:$0xff]
    %v921 = vld [vmem:[#allocation2 + $0x278] sm:$0xff]
    %v922 = vld [vmem:[#allocation2 + $0x280] sm:$0xff]
    %v923 = vld [vmem:[#allocation2 + $0x288] sm:$0xff]
    %v924 = vld [vmem:[#allocation2 + $0x290] sm:$0xff]
    %v925 = vld [vmem:[#allocation2 + $0x298] sm:$0xff]
    %v926 = vld [vmem:[#allocation2 + $0x2a0] sm:$0xff]
    %v927 = vld [vmem:[#allocation2 + $0x2a8] sm:$0xff]
    %v928 = vld [vmem:[#allocation2 + $0x2b0] sm:$0xff]
    %v929 = vld [vmem:[#allocation2 + $0x2b8] sm:$0xff]
    %v930 = vld [vmem:[#allocation2 + $0x2c0] sm:$0xff]
    %v931 = vld [vmem:[#allocation2 + $0x2c8] sm:$0xff]
    %v932 = vld [vmem:[#allocation2 + $0x2d0] sm:$0xff]
    %v933 = vld [vmem:[#allocation2 + $0x2d8] sm:$0xff]
    %v934 = vld [vmem:[#allocation2 + $0x2e0] sm:$0xff]
    %v935 = vld [vmem:[#allocation2 + $0x2e8] sm:$0xff]
    %v936 = vld [vmem:[#allocation2 + $0x2f0] sm:$0xff]
    %v937 = vld [vmem:[#allocation2 + $0x2f8] sm:$0xff]
    %v938 = vld [vmem:[#allocation2 + $0x300] sm:$0xff]
    %v939 = vld [vmem:[#allocation2 + $0x308] sm:$0xff]
    %v940 = vld [vmem:[#allocation2 + $0x310] sm:$0xff]
    %v941 = vld [vmem:[#allocation2 + $0x318] sm:$0xff]
    %v942 = vld [vmem:[#allocation2 + $0x320] sm:$0xff]
    %v943 = vld [vmem:[#allocation2 + $0x328] sm:$0xff]
    %v944 = vld [vmem:[#allocation2 + $0x330] sm:$0xff]
    %v945 = vld [vmem:[#allocation2 + $0x338] sm:$0xff]
    %v946 = vld [vmem:[#allocation2 + $0x340] sm:$0xff]
    %v947 = vld [vmem:[#allocation2 + $0x348] sm:$0xff]
    %v948 = vld [vmem:[#allocation2 + $0x350] sm:$0xff]
    %v949 = vld [vmem:[#allocation2 + $0x358] sm:$0xff]
    %v950 = vld [vmem:[#allocation2 + $0x360] sm:$0xff]
    %v951 = vld [vmem:[#allocation2 + $0x368] sm:$0xff]
    %v952 = vld [vmem:[#allocation2 + $0x370] sm:$0xff]
    %v953 = vld [vmem:[#allocation2 + $0x378] sm:$0xff]
    %v954 = vld [vmem:[#allocation2 + $0x380] sm:$0xff]
    %v955 = vld [vmem:[#allocation2 + $0x388] sm:$0xff]
    %v956 = vld [vmem:[#allocation2 + $0x390] sm:$0xff]
    %v957 = vld [vmem:[#allocation2 + $0x398] sm:$0xff]
    %v958 = vld [vmem:[#allocation2 + $0x3a0] sm:$0xff]
    %v959 = vld [vmem:[#allocation2 + $0x3a8] sm:$0xff]
    %v960 = vld [vmem:[#allocation2 + $0x3b0] sm:$0xff]
    %v961 = vld [vmem:[#allocation2 + $0x3b8] sm:$0xff]
    %v962 = vld [vmem:[#allocation2 + $0x3c0] sm:$0xff]
    %v963 = vld [vmem:[#allocation2 + $0x3c8] sm:$0xff]
    %v964 = vld [vmem:[#allocation2 + $0x3d0] sm:$0xff]
    %v965 = vld [vmem:[#allocation2 + $0x3d8] sm:$0xff]
    %v966 = vld [vmem:[#allocation2 + $0x3e0] sm:$0xff]
    %v967 = vld [vmem:[#allocation2 + $0x3e8] sm:$0xff]
    %v968 = vld [vmem:[#allocation2 + $0x3f0] sm:$0xff]
    %v969 = vld [vmem:[#allocation2 + $0x3f8] sm:$0xff]
    %v970 = vld [vmem:[#allocation2 + $0x400] sm:$0xff]
    %v971 = vld [vmem:[#allocation2 + $0x408] sm:$0xff]
    %v972 = vld [vmem:[#allocation2 + $0x410] sm:$0xff]
    %v973 = vld [vmem:[#allocation2 + $0x418] sm:$0xff]
    %v974 = vld [vmem:[#allocation2 + $0x420] sm:$0xff]
    %v975 = vld [vmem:[#allocation2 + $0x428] sm:$0xff]
    %v976 = vld [vmem:[#allocation2 + $0x430] sm:$0xff]
    %v977 = vld [vmem:[#allocation2 + $0x438] sm:$0xff]
    %v978 = vld [vmem:[#allocation2 + $0x440] sm:$0xff]
    %v979 = vld [vmem:[#allocation2 + $0x448] sm:$0xff]
    %v980 = vld [vmem:[#allocation2 + $0x450] sm:$0xff]
    %v981 = vld [vmem:[#allocation2 + $0x458] sm:$0xff]
    %v982 = vld [vmem:[#allocation2 + $0x460] sm:$0xff]
    %v983 = vld [vmem:[#allocation2 + $0x468] sm:$0xff]
    %v984 = vld [vmem:[#allocation2 + $0x470] sm:$0xff]
    %v985 = vld [vmem:[#allocation2 + $0x478] sm:$0xff]
    %v986 = vld [vmem:[#allocation2 + $0x480] sm:$0xff]
    %v987 = vld [vmem:[#allocation2 + $0x488] sm:$0xff]
    %v988 = vld [vmem:[#allocation2 + $0x490] sm:$0xff]
    %v989 = vld [vmem:[#allocation2 + $0x498] sm:$0xff]
    %v990 = vld [vmem:[#allocation2 + $0x4a0] sm:$0xff]
    %v991 = vld [vmem:[#allocation2 + $0x4a8] sm:$0xff]
    %v992 = vld [vmem:[#allocation2 + $0x4b0] sm:$0xff]
    %v993 = vld [vmem:[#allocation2 + $0x4b8] sm:$0xff]
    %v994 = vld [vmem:[#allocation2 + $0x4c0] sm:$0xff]
    %v995 = vld [vmem:[#allocation2 + $0x4c8] sm:$0xff]
    %v996 = vld [vmem:[#allocation2 + $0x4d0] sm:$0xff]
    %v997 = vld [vmem:[#allocation2 + $0x4d8] sm:$0xff]
    %v998 = vld [vmem:[#allocation2 + $0x4e0] sm:$0xff]
    %v999 = vld [vmem:[#allocation2 + $0x4e8] sm:$0xff]
    %v1000 = vld [vmem:[#allocation2 + $0x4f0] sm:$0xff]
    %v1001 = vld [vmem:[#allocation2 + $0x4f8] sm:$0xff]
    %v1002 = vld [vmem:[#allocation2 + $0x500] sm:$0xff]
    %v1003 = vld [vmem:[#allocation2 + $0x508] sm:$0xff]
    %v1004 = vld [vmem:[#allocation2 + $0x510] sm:$0xff]
    %v1005 = vld [vmem:[#allocation2 + $0x518] sm:$0xff]
    %v1006 = vld [vmem:[#allocation2 + $0x520] sm:$0xff]
    %v1007 = vld [vmem:[#allocation2 + $0x528] sm:$0xff]
    %v1008 = vld [vmem:[#allocation2 + $0x530] sm:$0xff]
    %v1009 = vld [vmem:[#allocation2 + $0x538] sm:$0xff]
    %v1010 = vld [vmem:[#allocation2 + $0x540] sm:$0xff]
    %v1011 = vld [vmem:[#allocation2 + $0x548] sm:$0xff]
    %v1012 = vld [vmem:[#allocation2 + $0x550] sm:$0xff]
    %v1013 = vld [vmem:[#allocation2 + $0x558] sm:$0xff]
    %v1014 = vld [vmem:[#allocation2 + $0x560] sm:$0xff]
    %v1015 = vld [vmem:[#allocation2 + $0x568] sm:$0xff]
    %v1016 = vld [vmem:[#allocation2 + $0x570] sm:$0xff]
    %v1017 = vld [vmem:[#allocation2 + $0x578] sm:$0xff]
    %v1018 = vld [vmem:[#allocation2 + $0x580] sm:$0xff]
    %v1019 = vld [vmem:[#allocation2 + $0x588] sm:$0xff]
    %v1020 = vld [vmem:[#allocation2 + $0x590] sm:$0xff]
    %v1021 = vld [vmem:[#allocation2 + $0x598] sm:$0xff]
    %v1022 = vld [vmem:[#allocation2 + $0x5a0] sm:$0xff]
    %v1023 = vld [vmem:[#allocation2 + $0x5a8] sm:$0xff]
    %v1024 = vld [vmem:[#allocation2 + $0x5b0] sm:$0xff]
    %v1025 = vld [vmem:[#allocation2 + $0x5b8] sm:$0xff]
    %v1026 = vld [vmem:[#allocation2 + $0x5c0] sm:$0xff]
    %v1027 = vld [vmem:[#allocation2 + $0x5c8] sm:$0xff]
    %v1028 = vld [vmem:[#allocation2 + $0x5d0] sm:$0xff]
    %v1029 = vld [vmem:[#allocation2 + $0x5d8] sm:$0xff]
    %v1030 = vld [vmem:[#allocation2 + $0x5e0] sm:$0xff]
    %v1031 = vld [vmem:[#allocation2 + $0x5e8] sm:$0xff]
    %v1032 = vld [vmem:[#allocation2 + $0x5f0] sm:$0xff]
    %v1033 = vld [vmem:[#allocation2 + $0x5f8] sm:$0xff]
    %v1034 = vld [vmem:[#allocation2 + $0x600] sm:$0xff]
    %v1035 = vld [vmem:[#allocation2 + $0x608] sm:$0xff]
    %v1036 = vld [vmem:[#allocation2 + $0x610] sm:$0xff]
    %v1037 = vld [vmem:[#allocation2 + $0x618] sm:$0xff]
    %v1038 = vld [vmem:[#allocation2 + $0x620] sm:$0xff]
    %v1039 = vld [vmem:[#allocation2 + $0x628] sm:$0xff]
    %v1040 = vld [vmem:[#allocation2 + $0x630] sm:$0xff]
    %v1041 = vld [vmem:[#allocation2 + $0x638] sm:$0xff]
    %v1042 = vld [vmem:[#allocation2 + $0x640] sm:$0xff]
    %v1043 = vld [vmem:[#allocation2 + $0x648] sm:$0xff]
    %v1044 = vld [vmem:[#allocation2 + $0x650] sm:$0xff]
    %v1045 = vld [vmem:[#allocation2 + $0x658] sm:$0xff]
    %v1046 = vld [vmem:[#allocation2 + $0x660] sm:$0xff]
    %v1047 = vld [vmem:[#allocation2 + $0x668] sm:$0xff]
    %v1048 = vld [vmem:[#allocation2 + $0x670] sm:$0xff]
    %v1049 = vld [vmem:[#allocation2 + $0x678] sm:$0xff]
    %v1050 = vld [vmem:[#allocation2 + $0x680] sm:$0xff]
    %v1051 = vld [vmem:[#allocation2 + $0x688] sm:$0xff]
    %v1052 = vld [vmem:[#allocation2 + $0x690] sm:$0xff]
    %v1053 = vld [vmem:[#allocation2 + $0x698] sm:$0xff]
    %v1054 = vld [vmem:[#allocation2 + $0x6a0] sm:$0xff]
    %v1055 = vld [vmem:[#allocation2 + $0x6a8] sm:$0xff]
    %v1056 = vld [vmem:[#allocation2 + $0x6b0] sm:$0xff]
    %v1057 = vld [vmem:[#allocation2 + $0x6b8] sm:$0xff]
    %v1058 = vld [vmem:[#allocation2 + $0x6c0] sm:$0xff]
    %v1059 = vld [vmem:[#allocation2 + $0x6c8] sm:$0xff]
    %v1060 = vld [vmem:[#allocation2 + $0x6d0] sm:$0xff]
    %v1061 = vld [vmem:[#allocation2 + $0x6d8] sm:$0xff]
    %v1062 = vld [vmem:[#allocation2 + $0x6e0] sm:$0xff]
    %v1063 = vld [vmem:[#allocation2 + $0x6e8] sm:$0xff]
    %v1064 = vld [vmem:[#allocation2 + $0x6f0] sm:$0xff]
    %v1065 = vld [vmem:[#allocation2 + $0x6f8] sm:$0xff]
    %v1066 = vld [vmem:[#allocation2 + $0x700] sm:$0xff]
    %v1067 = vld [vmem:[#allocation2 + $0x708] sm:$0xff]
    %v1068 = vld [vmem:[#allocation2 + $0x710] sm:$0xff]
    %v1069 = vld [vmem:[#allocation2 + $0x718] sm:$0xff]
    %v1070 = vld [vmem:[#allocation2 + $0x720] sm:$0xff]
    %v1071 = vld [vmem:[#allocation2 + $0x728] sm:$0xff]
    %v1072 = vld [vmem:[#allocation2 + $0x730] sm:$0xff]
    %v1073 = vld [vmem:[#allocation2 + $0x738] sm:$0xff]
    %v1074 = vld [vmem:[#allocation2 + $0x740] sm:$0xff]
    %v1075 = vld [vmem:[#allocation2 + $0x748] sm:$0xff]
    %v1076 = vld [vmem:[#allocation2 + $0x750] sm:$0xff]
    %v1077 = vld [vmem:[#allocation2 + $0x758] sm:$0xff]
    %v1078 = vld [vmem:[#allocation2 + $0x760] sm:$0xff]
    %v1079 = vld [vmem:[#allocation2 + $0x768] sm:$0xff]
    %v1080 = vld [vmem:[#allocation2 + $0x770] sm:$0xff]
    %v1081 = vld [vmem:[#allocation2 + $0x778] sm:$0xff]
    %v1082 = vld [vmem:[#allocation2 + $0x780] sm:$0xff]
    %v1083 = vld [vmem:[#allocation2 + $0x788] sm:$0xff]
    %v1084 = vld [vmem:[#allocation2 + $0x790] sm:$0xff]
    %v1085 = vld [vmem:[#allocation2 + $0x798] sm:$0xff]
    %v1086 = vld [vmem:[#allocation2 + $0x7a0] sm:$0xff]
    %v1087 = vld [vmem:[#allocation2 + $0x7a8] sm:$0xff]
    %v1088 = vld [vmem:[#allocation2 + $0x7b0] sm:$0xff]
    %v1089 = vld [vmem:[#allocation2 + $0x7b8] sm:$0xff]
    %v1090 = vld [vmem:[#allocation2 + $0x7c0] sm:$0xff]
    %v1091 = vld [vmem:[#allocation2 + $0x7c8] sm:$0xff]
    %v1092 = vld [vmem:[#allocation2 + $0x7d0] sm:$0xff]
    %v1093 = vld [vmem:[#allocation2 + $0x7d8] sm:$0xff]
    %v1094 = vld [vmem:[#allocation2 + $0x7e0] sm:$0xff]
    %v1095 = vld [vmem:[#allocation2 + $0x7e8] sm:$0xff]
    %v1096 = vld [vmem:[#allocation2 + $0x7f0] sm:$0xff]
    %v1097 = vld [vmem:[#allocation2 + $0x7f8] sm:$0xff]
    %v1098 = vld [vmem:[%s3] sm:$0xff]
    %v1099 = vld [vmem:[%s3 + $0x8] sm:$0xff]
    %vm1100 = vcmask 130048
    %v1102 = vsel %vm1100, %v187, 0
    %v1105 = vsel %vm1100, %v189, 0
    %v1108 = vsel %vm1100, %v191, 0
    %v1111 = vsel %vm1100, %v193, 0
    %v1114 = vsel %vm1100, %v195, 0
    %v1117 = vsel %vm1100, %v197, 0
    %v1120 = vsel %vm1100, %v199, 0
    %v1123 = vsel %vm1100, %v201, 0
    %1125 = vmatprep.subr.mxu0 0.0
    %1126 = vmatpush1.msra.mxu0 %v1098
    %1127 = vmatprep.subr.mxu0 0.0
    %1128 = vmatpush1.msra.mxu0 %v1099
    %1129 = vmatprep.subr.mxu0 0.0
    %1130 = vmatpush1.msra.mxu0 0.0
    %1131 = vmatprep.subr.mxu0 0.0
    %1132 = vmatpush1.msra.mxu0 0.0
    %1133 = vmatprep.subr.mxu0 0.0
    %1134 = vmatpush1.msra.mxu0 0.0
    %1135 = vmatprep.subr.mxu0 0.0
    %1136 = vmatpush1.msra.mxu0 0.0
    %1137 = vmatprep.subr.mxu0 0.0
    %1138 = vmatpush1.msra.mxu0 0.0
    %1139 = vmatprep.subr.mxu0 0.0
    %1140 = vmatpush1.msra.mxu0 0.0
    %1141 = vmatprep.subr.mxu0 0.0
    %1142 = vmatpush1.msra.mxu0 0.0
    %1143 = vmatprep.subr.mxu0 0.0
    %1144 = vmatpush1.msra.mxu0 0.0
    %1145 = vmatprep.subr.mxu0 0.0
    %1146 = vmatpush1.msra.mxu0 0.0
    %1147 = vmatprep.subr.mxu0 0.0
    %1148 = vmatpush1.msra.mxu0 0.0
    %1149 = vmatprep.subr.mxu0 0.0
    %1150 = vmatpush1.msra.mxu0 0.0
    %1151 = vmatprep.subr.mxu0 0.0
    %1152 = vmatpush1.msra.mxu0 0.0
    %1153 = vmatprep.subr.mxu0 0.0
    %1154 = vmatpush1.msra.mxu0 0.0
    %1155 = vmatprep.subr.mxu0 0.0
    %1156 = vmatpush1.msra.mxu0 0.0
    %1157 = vmatprep.subr.mxu0 0.0
    %1158 = vmatpush1.msra.mxu0 0.0
    %1159 = vmatprep.subr.mxu0 0.0
    %1160 = vmatpush1.msra.mxu0 0.0
    %1161 = vmatprep.subr.mxu0 0.0
    %1162 = vmatpush1.msra.mxu0 0.0
    %1163 = vmatprep.subr.mxu0 0.0
    %1164 = vmatpush1.msra.mxu0 0.0
    %1165 = vmatprep.subr.mxu0 0.0
    %1166 = vmatpush1.msra.mxu0 0.0
    %1167 = vmatprep.subr.mxu0 0.0
    %1168 = vmatpush1.msra.mxu0 0.0
    %1169 = vmatprep.subr.mxu0 0.0
    %1170 = vmatpush1.msra.mxu0 0.0
    %1171 = vmatprep.subr.mxu0 0.0
    %1172 = vmatpush1.msra.mxu0 0.0
    %1173 = vmatprep.subr.mxu0 0.0
    %1174 = vmatpush1.msra.mxu0 0.0
    %1175 = vmatprep.subr.mxu0 0.0
    %1176 = vmatpush1.msra.mxu0 0.0
    %1177 = vmatprep.subr.mxu0 0.0
    %1178 = vmatpush1.msra.mxu0 0.0
    %1179 = vmatprep.subr.mxu0 0.0
    %1180 = vmatpush1.msra.mxu0 0.0
    %1181 = vmatprep.subr.mxu0 0.0
    %1182 = vmatpush1.msra.mxu0 0.0
    %1183 = vmatprep.subr.mxu0 0.0
    %1184 = vmatpush1.msra.mxu0 0.0
    %1185 = vmatprep.subr.mxu0 0.0
    %1186 = vmatpush1.msra.mxu0 0.0
    %1187 = vmatprep.subr.mxu0 0.0
    %1188 = vmatpush1.msra.mxu0 0.0
    %1189 = vmatprep.mubr.f32.mxu0 0.0
    %1190 = vmatmul.mubr.f32.gmra.mrb[0].mxu0 %v1102
    %v1191 = vpop.f32.mrb[0].mxu0
    %v1192 = vadd.f32 0.0, %v1191
    %v1193 = vpop.f32.mrb[0].mxu0
    %1194 = vmatprep.mubr.f32.mxu0 0.0
    %1195 = vmatmul.mubr.f32.gmra.mrb[0].mxu0 %v1105
    %v1196 = vpop.f32.mrb[0].mxu0
    %v1197 = vadd.f32 0.0, %v1196
    %v1198 = vpop.f32.mrb[0].mxu0
    %1199 = vmatprep.mubr.f32.mxu0 0.0
    %1200 = vmatmul.mubr.f32.gmra.mrb[0].mxu0 %v1108
    %v1201 = vpop.f32.mrb[0].mxu0
    %v1202 = vadd.f32 0.0, %v1201
    %v1203 = vpop.f32.mrb[0].mxu0
    %1204 = vmatprep.mubr.f32.mxu0 0.0
    %1205 = vmatmul.mubr.f32.gmra.mrb[0].mxu0 %v1111
    %v1206 = vpop.f32.mrb[0].mxu0
    %v1207 = vadd.f32 0.0, %v1206
    %v1208 = vpop.f32.mrb[0].mxu0
    %1209 = vmatprep.mubr.f32.mxu0 0.0
    %1210 = vmatmul.mubr.f32.gmra.mrb[0].mxu0 %v1114
    %v1211 = vpop.f32.mrb[0].mxu0
    %v1212 = vadd.f32 0.0, %v1211
    %v1213 = vpop.f32.mrb[0].mxu0
    %1214 = vmatprep.mubr.f32.mxu0 0.0
    %1215 = vmatmul.mubr.f32.gmra.mrb[0].mxu0 %v1117
    %v1216 = vpop.f32.mrb[0].mxu0
    %v1217 = vadd.f32 0.0, %v1216
    %v1218 = vpop.f32.mrb[0].mxu0
    %1219 = vmatprep.mubr.f32.mxu0 0.0
    %1220 = vmatmul.mubr.f32.gmra.mrb[0].mxu0 %v1120
    %v1221 = vpop.f32.mrb[0].mxu0
    %v1222 = vadd.f32 0.0, %v1221
    %v1223 = vpop.f32.mrb[0].mxu0
    %1224 = vmatprep.mubr.f32.mxu0 0.0
    %1225 = vmatmul.mubr.f32.gmra.mrb[0].mxu0 %v1123
    %v1226 = vpop.f32.mrb[0].mxu0
    %v1227 = vadd.f32 0.0, %v1226
    %v1228 = vpop.f32.mrb[0].mxu0
    %1229 = vdwg.mxu0
    %1230 = vmatprep.subr.mxu0 0.0
    %1231 = vmatpush1.msra.mxu0 %v842
    %1232 = vmatprep.subr.mxu0 0.0
    %1233 = vmatpush1.msra.mxu0 %v843
    %1234 = vmatprep.subr.mxu0 0.0
    %1235 = vmatpush1.msra.mxu0 %v844
    %1236 = vmatprep.subr.mxu0 0.0
    %1237 = vmatpush1.msra.mxu0 %v845
    %1238 = vmatprep.subr.mxu0 0.0
    %1239 = vmatpush1.msra.mxu0 %v846
    %1240 = vmatprep.subr.mxu0 0.0
    %1241 = vmatpush1.msra.mxu0 %v847
    %1242 = vmatprep.subr.mxu0 0.0
    %1243 = vmatpush1.msra.mxu0 %v848
    %1244 = vmatprep.subr.mxu0 0.0
    %1245 = vmatpush1.msra.mxu0 %v849
    %1246 = vmatprep.subr.mxu0 0.0
    %1247 = vmatpush1.msra.mxu0 %v850
    %1248 = vmatprep.subr.mxu0 0.0
    %1249 = vmatpush1.msra.mxu0 %v851
    %1250 = vmatprep.subr.mxu0 0.0
    %1251 = vmatpush1.msra.mxu0 %v852
    %1252 = vmatprep.subr.mxu0 0.0
    %1253 = vmatpush1.msra.mxu0 %v853
    %1254 = vmatprep.subr.mxu0 0.0
    %1255 = vmatpush1.msra.mxu0 %v854
    %1256 = vmatprep.subr.mxu0 0.0
    %1257 = vmatpush1.msra.mxu0 %v855
    %1258 = vmatprep.subr.mxu0 0.0
    %1259 = vmatpush1.msra.mxu0 %v856
    %1260 = vmatprep.subr.mxu0 0.0
    %1261 = vmatpush1.msra.mxu0 %v857
    %1262 = vmatprep.subr.mxu0 0.0
    %1263 = vmatpush1.msra.mxu0 %v858
    %1264 = vmatprep.subr.mxu0 0.0
    %1265 = vmatpush1.msra.mxu0 %v859
    %1266 = vmatprep.subr.mxu0 0.0
    %1267 = vmatpush1.msra.mxu0 %v860
    %1268 = vmatprep.subr.mxu0 0.0
    %1269 = vmatpush1.msra.mxu0 %v861
    %1270 = vmatprep.subr.mxu0 0.0
    %1271 = vmatpush1.msra.mxu0 %v862
    %1272 = vmatprep.subr.mxu0 0.0
    %1273 = vmatpush1.msra.mxu0 %v863
    %1274 = vmatprep.subr.mxu0 0.0
    %1275 = vmatpush1.msra.mxu0 %v864
    %1276 = vmatprep.subr.mxu0 0.0
    %1277 = vmatpush1.msra.mxu0 %v865
    %1278 = vmatprep.subr.mxu0 0.0
    %1279 = vmatpush1.msra.mxu0 %v866
    %1280 = vmatprep.subr.mxu0 0.0
    %1281 = vmatpush1.msra.mxu0 %v867
    %1282 = vmatprep.subr.mxu0 0.0
    %1283 = vmatpush1.msra.mxu0 %v868
    %1284 = vmatprep.subr.mxu0 0.0
    %1285 = vmatpush1.msra.mxu0 %v869
    %1286 = vmatprep.subr.mxu0 0.0
    %1287 = vmatpush1.msra.mxu0 %v870
    %1288 = vmatprep.subr.mxu0 0.0
    %1289 = vmatpush1.msra.mxu0 %v871
    %1290 = vmatprep.subr.mxu0 0.0
    %1291 = vmatpush1.msra.mxu0 %v872
    %1292 = vmatprep.subr.mxu0 0.0
    %1293 = vmatpush1.msra.mxu0 %v873
    %1294 = vmatprep.mubr.f32.mxu0 %v274
    %1295 = vmatmul.mubr.f32.gmra.mrb[0].mxu0 %v234
    %v1296 = vpop.f32.mrb[0].mxu0
    %v1297 = vadd.f32 %v1192, %v1296
    %v1298 = vpop.f32.mrb[0].mxu0
    %1299 = vmatprep.mubr.f32.mxu0 %v275
    %1300 = vmatmul.mubr.f32.gmra.mrb[0].mxu0 %v235
    %v1301 = vpop.f32.mrb[0].mxu0
    %v1302 = vadd.f32 %v1197, %v1301
    %v1303 = vpop.f32.mrb[0].mxu0
    %1304 = vmatprep.mubr.f32.mxu0 %v276
    %1305 = vmatmul.mubr.f32.gmra.mrb[0].mxu0 %v236
    %v1306 = vpop.f32.mrb[0].mxu0
    %v1307 = vadd.f32 %v1202, %v1306
    %v1308 = vpop.f32.mrb[0].mxu0
    %1309 = vmatprep.mubr.f32.mxu0 %v277
    %1310 = vmatmul.mubr.f32.gmra.mrb[0].mxu0 %v237
    %v1311 = vpop.f32.mrb[0].mxu0
    %v1312 = vadd.f32 %v1207, %v1311
    %v1313 = vpop.f32.mrb[0].mxu0
    %1314 = vmatprep.mubr.f32.mxu0 %v278
    %1315 = vmatmul.mubr.f32.gmra.mrb[0].mxu0 %v238
    %v1316 = vpop.f32.mrb[0].mxu0
    %v1317 = vadd.f32 %v1212, %v1316
    %v1318 = vpop.f32.mrb[0].mxu0
    %1319 = vmatprep.mubr.f32.mxu0 %v279
    %1320 = vmatmul.mubr.f32.gmra.mrb[0].mxu0 %v239
    %v1321 = vpop.f32.mrb[0].mxu0
    %v1322 = vadd.f32 %v1217, %v1321
    %v1323 = vpop.f32.mrb[0].mxu0
    %1324 = vmatprep.mubr.f32.mxu0 %v280
    %1325 = vmatmul.mubr.f32.gmra.mrb[0].mxu0 %v240
    %v1326 = vpop.f32.mrb[0].mxu0
    %v1327 = vadd.f32 %v1222, %v1326
    %v1328 = vpop.f32.mrb[0].mxu0
    %1329 = vmatprep.mubr.f32.mxu0 %v281
    %1330 = vmatmul.mubr.f32.gmra.mrb[0].mxu0 %v241
    %v1331 = vpop.f32.mrb[0].mxu0
    %v1332 = vadd.f32 %v1227, %v1331
    %v1333 = vpop.f32.mrb[0].mxu0
    %1334 = vdwg.mxu0
    %1335 = vmatprep.subr.mxu0 0.0
    %1336 = vmatpush1.msra.mxu0 %v874
    %1337 = vmatprep.subr.mxu0 0.0
    %1338 = vmatpush1.msra.mxu0 %v875
    %1339 = vmatprep.subr.mxu0 0.0
    %1340 = vmatpush1.msra.mxu0 %v876
    %1341 = vmatprep.subr.mxu0 0.0
    %1342 = vmatpush1.msra.mxu0 %v877
    %1343 = vmatprep.subr.mxu0 0.0
    %1344 = vmatpush1.msra.mxu0 %v878
    %1345 = vmatprep.subr.mxu0 0.0
    %1346 = vmatpush1.msra.mxu0 %v879
    %1347 = vmatprep.subr.mxu0 0.0
    %1348 = vmatpush1.msra.mxu0 %v880
    %1349 = vmatprep.subr.mxu0 0.0
    %1350 = vmatpush1.msra.mxu0 %v881
    %1351 = vmatprep.subr.mxu0 0.0
    %1352 = vmatpush1.msra.mxu0 %v882
    %1353 = vmatprep.subr.mxu0 0.0
    %1354 = vmatpush1.msra.mxu0 %v883
    %1355 = vmatprep.subr.mxu0 0.0
    %1356 = vmatpush1.msra.mxu0 %v884
    %1357 = vmatprep.subr.mxu0 0.0
    %1358 = vmatpush1.msra.mxu0 %v885
    %1359 = vmatprep.subr.mxu0 0.0
    %1360 = vmatpush1.msra.mxu0 %v886
    %1361 = vmatprep.subr.mxu0 0.0
    %1362 = vmatpush1.msra.mxu0 %v887
    %1363 = vmatprep.subr.mxu0 0.0
    %1364 = vmatpush1.msra.mxu0 %v888
    %1365 = vmatprep.subr.mxu0 0.0
    %1366 = vmatpush1.msra.mxu0 %v889
    %1367 = vmatprep.subr.mxu0 0.0
    %1368 = vmatpush1.msra.mxu0 %v890
    %1369 = vmatprep.subr.mxu0 0.0
    %1370 = vmatpush1.msra.mxu0 %v891
    %1371 = vmatprep.subr.mxu0 0.0
    %1372 = vmatpush1.msra.mxu0 %v892
    %1373 = vmatprep.subr.mxu0 0.0
    %1374 = vmatpush1.msra.mxu0 %v893
    %1375 = vmatprep.subr.mxu0 0.0
    %1376 = vmatpush1.msra.mxu0 %v894
    %1377 = vmatprep.subr.mxu0 0.0
    %1378 = vmatpush1.msra.mxu0 %v895
    %1379 = vmatprep.subr.mxu0 0.0
    %1380 = vmatpush1.msra.mxu0 %v896
    %1381 = vmatprep.subr.mxu0 0.0
    %1382 = vmatpush1.msra.mxu0 %v897
    %1383 = vmatprep.subr.mxu0 0.0
    %1384 = vmatpush1.msra.mxu0 %v898
    %1385 = vmatprep.subr.mxu0 0.0
    %1386 = vmatpush1.msra.mxu0 %v899
    %1387 = vmatprep.subr.mxu0 0.0
    %1388 = vmatpush1.msra.mxu0 %v900
    %1389 = vmatprep.subr.mxu0 0.0
    %1390 = vmatpush1.msra.mxu0 %v901
    %1391 = vmatprep.subr.mxu0 0.0
    %1392 = vmatpush1.msra.mxu0 %v902
    %1393 = vmatprep.subr.mxu0 0.0
    %1394 = vmatpush1.msra.mxu0 %v903
    %1395 = vmatprep.subr.mxu0 0.0
    %1396 = vmatpush1.msra.mxu0 %v904
    %1397 = vmatprep.subr.mxu0 0.0
    %1398 = vmatpush1.msra.mxu0 %v905
    %1399 = vmatprep.mubr.f32.mxu0 %v354
    %1400 = vmatmul.mubr.f32.gmra.mrb[0].mxu0 %v314
    %v1401 = vpop.f32.mrb[0].mxu0
    %v1402 = vadd.f32 %v1297, %v1401
    %v1403 = vpop.f32.mrb[0].mxu0
    %1404 = vmatprep.mubr.f32.mxu0 %v355
    %1405 = vmatmul.mubr.f32.gmra.mrb[0].mxu0 %v315
    %v1406 = vpop.f32.mrb[0].mxu0
    %v1407 = vadd.f32 %v1302, %v1406
    %v1408 = vpop.f32.mrb[0].mxu0
    %1409 = vmatprep.mubr.f32.mxu0 %v356
    %1410 = vmatmul.mubr.f32.gmra.mrb[0].mxu0 %v316
    %v1411 = vpop.f32.mrb[0].mxu0
    %v1412 = vadd.f32 %v1307, %v1411
    %v1413 = vpop.f32.mrb[0].mxu0
    %1414 = vmatprep.mubr.f32.mxu0 %v357
    %1415 = vmatmul.mubr.f32.gmra.mrb[0].mxu0 %v317
    %v1416 = vpop.f32.mrb[0].mxu0
    %v1417 = vadd.f32 %v1312, %v1416
    %v1418 = vpop.f32.mrb[0].mxu0
    %1419 = vmatprep.mubr.f32.mxu0 %v358
    %1420 = vmatmul.mubr.f32.gmra.mrb[0].mxu0 %v318
    %v1421 = vpop.f32.mrb[0].mxu0
    %v1422 = vadd.f32 %v1317, %v1421
    %v1423 = vpop.f32.mrb[0].mxu0
    %1424 = vmatprep.mubr.f32.mxu0 %v359
    %1425 = vmatmul.mubr.f32.gmra.mrb[0].mxu0 %v319
    %v1426 = vpop.f32.mrb[0].mxu0
    %v1427 = vadd.f32 %v1322, %v1426
    %v1428 = vpop.f32.mrb[0].mxu0
    %1429 = vmatprep.mubr.f32.mxu0 %v360
    %1430 = vmatmul.mubr.f32.gmra.mrb[0].mxu0 %v320
    %v1431 = vpop.f32.mrb[0].mxu0
    %v1432 = vadd.f32 %v1327, %v1431
    %v1433 = vpop.f32.mrb[0].mxu0
    %1434 = vmatprep.mubr.f32.mxu0 %v361
    %1435 = vmatmul.mubr.f32.gmra.mrb[0].mxu0 %v321
    %v1436 = vpop.f32.mrb[0].mxu0
    %v1437 = vadd.f32 %v1332, %v1436
    %v1438 = vpop.f32.mrb[0].mxu0
    %1439 = vdwg.mxu0
    %1440 = vmatprep.subr.mxu0 0.0
    %1441 = vmatpush1.msra.mxu0 %v906
    %1442 = vmatprep.subr.mxu0 0.0
    %1443 = vmatpush1.msra.mxu0 %v907
    %1444 = vmatprep.subr.mxu0 0.0
    %1445 = vmatpush1.msra.mxu0 %v908
    %1446 = vmatprep.subr.mxu0 0.0
    %1447 = vmatpush1.msra.mxu0 %v909
    %1448 = vmatprep.subr.mxu0 0.0
    %1449 = vmatpush1.msra.mxu0 %v910
    %1450 = vmatprep.subr.mxu0 0.0
    %1451 = vmatpush1.msra.mxu0 %v911
    %1452 = vmatprep.subr.mxu0 0.0
    %1453 = vmatpush1.msra.mxu0 %v912
    %1454 = vmatprep.subr.mxu0 0.0
    %1455 = vmatpush1.msra.mxu0 %v913
    %1456 = vmatprep.subr.mxu0 0.0
    %1457 = vmatpush1.msra.mxu0 %v914
    %1458 = vmatprep.subr.mxu0 0.0
    %1459 = vmatpush1.msra.mxu0 %v915
    %1460 = vmatprep.subr.mxu0 0.0
    %1461 = vmatpush1.msra.mxu0 %v916
    %1462 = vmatprep.subr.mxu0 0.0
    %1463 = vmatpush1.msra.mxu0 %v917
    %1464 = vmatprep.subr.mxu0 0.0
    %1465 = vmatpush1.msra.mxu0 %v918
    %1466 = vmatprep.subr.mxu0 0.0
    %1467 = vmatpush1.msra.mxu0 %v919
    %1468 = vmatprep.subr.mxu0 0.0
    %1469 = vmatpush1.msra.mxu0 %v920
    %1470 = vmatprep.subr.mxu0 0.0
    %1471 = vmatpush1.msra.mxu0 %v921
    %1472 = vmatprep.subr.mxu0 0.0
    %1473 = vmatpush1.msra.mxu0 %v922
    %1474 = vmatprep.subr.mxu0 0.0
    %1475 = vmatpush1.msra.mxu0 %v923
    %1476 = vmatprep.subr.mxu0 0.0
    %1477 = vmatpush1.msra.mxu0 %v924
    %1478 = vmatprep.subr.mxu0 0.0
    %1479 = vmatpush1.msra.mxu0 %v925
    %1480 = vmatprep.subr.mxu0 0.0
    %1481 = vmatpush1.msra.mxu0 %v926
    %1482 = vmatprep.subr.mxu0 0.0
    %1483 = vmatpush1.msra.mxu0 %v927
    %1484 = vmatprep.subr.mxu0 0.0
    %1485 = vmatpush1.msra.mxu0 %v928
    %1486 = vmatprep.subr.mxu0 0.0
    %1487 = vmatpush1.msra.mxu0 %v929
    %1488 = vmatprep.subr.mxu0 0.0
    %1489 = vmatpush1.msra.mxu0 %v930
    %1490 = vmatprep.subr.mxu0 0.0
    %1491 = vmatpush1.msra.mxu0 %v931
    %1492 = vmatprep.subr.mxu0 0.0
    %1493 = vmatpush1.msra.mxu0 %v932
    %1494 = vmatprep.subr.mxu0 0.0
    %1495 = vmatpush1.msra.mxu0 %v933
    %1496 = vmatprep.subr.mxu0 0.0
    %1497 = vmatpush1.msra.mxu0 %v934
    %1498 = vmatprep.subr.mxu0 0.0
    %1499 = vmatpush1.msra.mxu0 %v935
    %1500 = vmatprep.subr.mxu0 0.0
    %1501 = vmatpush1.msra.mxu0 %v936
    %1502 = vmatprep.subr.mxu0 0.0
    %1503 = vmatpush1.msra.mxu0 %v937
    %1504 = vmatprep.mubr.f32.mxu0 %v434
    %1505 = vmatmul.mubr.f32.gmra.mrb[0].mxu0 %v394
    %v1506 = vpop.f32.mrb[0].mxu0
    %v1507 = vadd.f32 %v1402, %v1506
    %v1508 = vpop.f32.mrb[0].mxu0
    %1509 = vmatprep.mubr.f32.mxu0 %v435
    %1510 = vmatmul.mubr.f32.gmra.mrb[0].mxu0 %v395
    %v1511 = vpop.f32.mrb[0].mxu0
    %v1512 = vadd.f32 %v1407, %v1511
    %v1513 = vpop.f32.mrb[0].mxu0
    %1514 = vmatprep.mubr.f32.mxu0 %v436
    %1515 = vmatmul.mubr.f32.gmra.mrb[0].mxu0 %v396
    %v1516 = vpop.f32.mrb[0].mxu0
    %v1517 = vadd.f32 %v1412, %v1516
    %v1518 = vpop.f32.mrb[0].mxu0
    %1519 = vmatprep.mubr.f32.mxu0 %v437
    %1520 = vmatmul.mubr.f32.gmra.mrb[0].mxu0 %v397
    %v1521 = vpop.f32.mrb[0].mxu0
    %v1522 = vadd.f32 %v1417, %v1521
    %v1523 = vpop.f32.mrb[0].mxu0
    %1524 = vmatprep.mubr.f32.mxu0 %v438
    %1525 = vmatmul.mubr.f32.gmra.mrb[0].mxu0 %v398
    %v1526 = vpop.f32.mrb[0].mxu0
    %v1527 = vadd.f32 %v1422, %v1526
    %v1528 = vpop.f32.mrb[0].mxu0
    %1529 = vmatprep.mubr.f32.mxu0 %v439
    %1530 = vmatmul.mubr.f32.gmra.mrb[0].mxu0 %v399
    %v1531 = vpop.f32.mrb[0].mxu0
    %v1532 = vadd.f32 %v1427, %v1531
    %v1533 = vpop.f32.mrb[0].mxu0
    %1534 = vmatprep.mubr.f32.mxu0 %v440
    %1535 = vmatmul.mubr.f32.gmra.mrb[0].mxu0 %v400
    %v1536 = vpop.f32.mrb[0].mxu0
    %v1537 = vadd.f32 %v1432, %v1536
    %v1538 = vpop.f32.mrb[0].mxu0
    %1539 = vmatprep.mubr.f32.mxu0 %v441
    %1540 = vmatmul.mubr.f32.gmra.mrb[0].mxu0 %v401
    %v1541 = vpop.f32.mrb[0].mxu0
    %v1542 = vadd.f32 %v1437, %v1541
    %v1543 = vpop.f32.mrb[0].mxu0
    %1544 = vdwg.mxu0
    %1545 = vmatprep.subr.mxu0 0.0
    %1546 = vmatpush1.msra.mxu0 %v938
    %1547 = vmatprep.subr.mxu0 0.0
    %1548 = vmatpush1.msra.mxu0 %v939
    %1549 = vmatprep.subr.mxu0 0.0
    %1550 = vmatpush1.msra.mxu0 %v940
    %1551 = vmatprep.subr.mxu0 0.0
    %1552 = vmatpush1.msra.mxu0 %v941
    %1553 = vmatprep.subr.mxu0 0.0
    %1554 = vmatpush1.msra.mxu0 %v942
    %1555 = vmatprep.subr.mxu0 0.0
    %1556 = vmatpush1.msra.mxu0 %v943
    %1557 = vmatprep.subr.mxu0 0.0
    %1558 = vmatpush1.msra.mxu0 %v944
    %1559 = vmatprep.subr.mxu0 0.0
    %1560 = vmatpush1.msra.mxu0 %v945
    %1561 = vmatprep.subr.mxu0 0.0
    %1562 = vmatpush1.msra.mxu0 %v946
    %1563 = vmatprep.subr.mxu0 0.0
    %1564 = vmatpush1.msra.mxu0 %v947
    %1565 = vmatprep.subr.mxu0 0.0
    %1566 = vmatpush1.msra.mxu0 %v948
    %1567 = vmatprep.subr.mxu0 0.0
    %1568 = vmatpush1.msra.mxu0 %v949
    %1569 = vmatprep.subr.mxu0 0.0
    %1570 = vmatpush1.msra.mxu0 %v950
    %1571 = vmatprep.subr.mxu0 0.0
    %1572 = vmatpush1.msra.mxu0 %v951
    %1573 = vmatprep.subr.mxu0 0.0
    %1574 = vmatpush1.msra.mxu0 %v952
    %1575 = vmatprep.subr.mxu0 0.0
    %1576 = vmatpush1.msra.mxu0 %v953
    %1577 = vmatprep.subr.mxu0 0.0
    %1578 = vmatpush1.msra.mxu0 %v954
    %1579 = vmatprep.subr.mxu0 0.0
    %1580 = vmatpush1.msra.mxu0 %v955
    %1581 = vmatprep.subr.mxu0 0.0
    %1582 = vmatpush1.msra.mxu0 %v956
    %1583 = vmatprep.subr.mxu0 0.0
    %1584 = vmatpush1.msra.mxu0 %v957
    %1585 = vmatprep.subr.mxu0 0.0
    %1586 = vmatpush1.msra.mxu0 %v958
    %1587 = vmatprep.subr.mxu0 0.0
    %1588 = vmatpush1.msra.mxu0 %v959
    %1589 = vmatprep.subr.mxu0 0.0
    %1590 = vmatpush1.msra.mxu0 %v960
    %1591 = vmatprep.subr.mxu0 0.0
    %1592 = vmatpush1.msra.mxu0 %v961
    %1593 = vmatprep.subr.mxu0 0.0
    %1594 = vmatpush1.msra.mxu0 %v962
    %1595 = vmatprep.subr.mxu0 0.0
    %1596 = vmatpush1.msra.mxu0 %v963
    %1597 = vmatprep.subr.mxu0 0.0
    %1598 = vmatpush1.msra.mxu0 %v964
    %1599 = vmatprep.subr.mxu0 0.0
    %1600 = vmatpush1.msra.mxu0 %v965
    %1601 = vmatprep.subr.mxu0 0.0
    %1602 = vmatpush1.msra.mxu0 %v966
    %1603 = vmatprep.subr.mxu0 0.0
    %1604 = vmatpush1.msra.mxu0 %v967
    %1605 = vmatprep.subr.mxu0 0.0
    %1606 = vmatpush1.msra.mxu0 %v968
    %1607 = vmatprep.subr.mxu0 0.0
    %1608 = vmatpush1.msra.mxu0 %v969
    %1609 = vmatprep.mubr.f32.mxu0 %v514
    %1610 = vmatmul.mubr.f32.gmra.mrb[0].mxu0 %v474
    %v1611 = vpop.f32.mrb[0].mxu0
    %v1612 = vadd.f32 %v1507, %v1611
    %v1613 = vpop.f32.mrb[0].mxu0
    %1614 = vmatprep.mubr.f32.mxu0 %v515
    %1615 = vmatmul.mubr.f32.gmra.mrb[0].mxu0 %v475
    %v1616 = vpop.f32.mrb[0].mxu0
    %v1617 = vadd.f32 %v1512, %v1616
    %v1618 = vpop.f32.mrb[0].mxu0
    %1619 = vmatprep.mubr.f32.mxu0 %v516
    %1620 = vmatmul.mubr.f32.gmra.mrb[0].mxu0 %v476
    %v1621 = vpop.f32.mrb[0].mxu0
    %v1622 = vadd.f32 %v1517, %v1621
    %v1623 = vpop.f32.mrb[0].mxu0
    %1624 = vmatprep.mubr.f32.mxu0 %v517
    %1625 = vmatmul.mubr.f32.gmra.mrb[0].mxu0 %v477
    %v1626 = vpop.f32.mrb[0].mxu0
    %v1627 = vadd.f32 %v1522, %v1626
    %v1628 = vpop.f32.mrb[0].mxu0
    %1629 = vmatprep.mubr.f32.mxu0 %v518
    %1630 = vmatmul.mubr.f32.gmra.mrb[0].mxu0 %v478
    %v1631 = vpop.f32.mrb[0].mxu0
    %v1632 = vadd.f32 %v1527, %v1631
    %v1633 = vpop.f32.mrb[0].mxu0
    %1634 = vmatprep.mubr.f32.mxu0 %v519
    %1635 = vmatmul.mubr.f32.gmra.mrb[0].mxu0 %v479
    %v1636 = vpop.f32.mrb[0].mxu0
    %v1637 = vadd.f32 %v1532, %v1636
    %v1638 = vpop.f32.mrb[0].mxu0
    %1639 = vmatprep.mubr.f32.mxu0 %v520
    %1640 = vmatmul.mubr.f32.gmra.mrb[0].mxu0 %v480
    %v1641 = vpop.f32.mrb[0].mxu0
    %v1642 = vadd.f32 %v1537, %v1641
    %v1643 = vpop.f32.mrb[0].mxu0
    %1644 = vmatprep.mubr.f32.mxu0 %v521
    %1645 = vmatmul.mubr.f32.gmra.mrb[0].mxu0 %v481
    %v1646 = vpop.f32.mrb[0].mxu0
    %v1647 = vadd.f32 %v1542, %v1646
    %v1648 = vpop.f32.mrb[0].mxu0
    %1649 = vdwg.mxu0
    %1650 = vmatprep.subr.mxu0 0.0
    %1651 = vmatpush1.msra.mxu0 %v970
    %1652 = vmatprep.subr.mxu0 0.0
    %1653 = vmatpush1.msra.mxu0 %v971
    %1654 = vmatprep.subr.mxu0 0.0
    %1655 = vmatpush1.msra.mxu0 %v972
    %1656 = vmatprep.subr.mxu0 0.0
    %1657 = vmatpush1.msra.mxu0 %v973
    %1658 = vmatprep.subr.mxu0 0.0
    %1659 = vmatpush1.msra.mxu0 %v974
    %1660 = vmatprep.subr.mxu0 0.0
    %1661 = vmatpush1.msra.mxu0 %v975
    %1662 = vmatprep.subr.mxu0 0.0
    %1663 = vmatpush1.msra.mxu0 %v976
    %1664 = vmatprep.subr.mxu0 0.0
    %1665 = vmatpush1.msra.mxu0 %v977
    %1666 = vmatprep.subr.mxu0 0.0
    %1667 = vmatpush1.msra.mxu0 %v978
    %1668 = vmatprep.subr.mxu0 0.0
    %1669 = vmatpush1.msra.mxu0 %v979
    %1670 = vmatprep.subr.mxu0 0.0
    %1671 = vmatpush1.msra.mxu0 %v980
    %1672 = vmatprep.subr.mxu0 0.0
    %1673 = vmatpush1.msra.mxu0 %v981
    %1674 = vmatprep.subr.mxu0 0.0
    %1675 = vmatpush1.msra.mxu0 %v982
    %1676 = vmatprep.subr.mxu0 0.0
    %1677 = vmatpush1.msra.mxu0 %v983
    %1678 = vmatprep.subr.mxu0 0.0
    %1679 = vmatpush1.msra.mxu0 %v984
    %1680 = vmatprep.subr.mxu0 0.0
    %1681 = vmatpush1.msra.mxu0 %v985
    %1682 = vmatprep.subr.mxu0 0.0
    %1683 = vmatpush1.msra.mxu0 %v986
    %1684 = vmatprep.subr.mxu0 0.0
    %1685 = vmatpush1.msra.mxu0 %v987
    %1686 = vmatprep.subr.mxu0 0.0
    %1687 = vmatpush1.msra.mxu0 %v988
    %1688 = vmatprep.subr.mxu0 0.0
    %1689 = vmatpush1.msra.mxu0 %v989
    %1690 = vmatprep.subr.mxu0 0.0
    %1691 = vmatpush1.msra.mxu0 %v990
    %1692 = vmatprep.subr.mxu0 0.0
    %1693 = vmatpush1.msra.mxu0 %v991
    %1694 = vmatprep.subr.mxu0 0.0
    %1695 = vmatpush1.msra.mxu0 %v992
    %1696 = vmatprep.subr.mxu0 0.0
    %1697 = vmatpush1.msra.mxu0 %v993
    %1698 = vmatprep.subr.mxu0 0.0
    %1699 = vmatpush1.msra.mxu0 %v994
    %1700 = vmatprep.subr.mxu0 0.0
    %1701 = vmatpush1.msra.mxu0 %v995
    %1702 = vmatprep.subr.mxu0 0.0
    %1703 = vmatpush1.msra.mxu0 %v996
    %1704 = vmatprep.subr.mxu0 0.0
    %1705 = vmatpush1.msra.mxu0 %v997
    %1706 = vmatprep.subr.mxu0 0.0
    %1707 = vmatpush1.msra.mxu0 %v998
    %1708 = vmatprep.subr.mxu0 0.0
    %1709 = vmatpush1.msra.mxu0 %v999
    %1710 = vmatprep.subr.mxu0 0.0
    %1711 = vmatpush1.msra.mxu0 %v1000
    %1712 = vmatprep.subr.mxu0 0.0
    %1713 = vmatpush1.msra.mxu0 %v1001
    %1714 = vmatprep.mubr.f32.mxu0 %v594
    %1715 = vmatmul.mubr.f32.gmra.mrb[0].mxu0 %v554
    %v1716 = vpop.f32.mrb[0].mxu0
    %v1717 = vadd.f32 %v1612, %v1716
    %v1718 = vpop.f32.mrb[0].mxu0
    %1719 = vmatprep.mubr.f32.mxu0 %v595
    %1720 = vmatmul.mubr.f32.gmra.mrb[0].mxu0 %v555
    %v1721 = vpop.f32.mrb[0].mxu0
    %v1722 = vadd.f32 %v1617, %v1721
    %v1723 = vpop.f32.mrb[0].mxu0
    %1724 = vmatprep.mubr.f32.mxu0 %v596
    %1725 = vmatmul.mubr.f32.gmra.mrb[0].mxu0 %v556
    %v1726 = vpop.f32.mrb[0].mxu0
    %v1727 = vadd.f32 %v1622, %v1726
    %v1728 = vpop.f32.mrb[0].mxu0
    %1729 = vmatprep.mubr.f32.mxu0 %v597
    %1730 = vmatmul.mubr.f32.gmra.mrb[0].mxu0 %v557
    %v1731 = vpop.f32.mrb[0].mxu0
    %v1732 = vadd.f32 %v1627, %v1731
    %v1733 = vpop.f32.mrb[0].mxu0
    %1734 = vmatprep.mubr.f32.mxu0 %v598
    %1735 = vmatmul.mubr.f32.gmra.mrb[0].mxu0 %v558
    %v1736 = vpop.f32.mrb[0].mxu0
    %v1737 = vadd.f32 %v1632, %v1736
    %v1738 = vpop.f32.mrb[0].mxu0
    %1739 = vmatprep.mubr.f32.mxu0 %v599
    %1740 = vmatmul.mubr.f32.gmra.mrb[0].mxu0 %v559
    %v1741 = vpop.f32.mrb[0].mxu0
    %v1742 = vadd.f32 %v1637, %v1741
    %v1743 = vpop.f32.mrb[0].mxu0
    %1744 = vmatprep.mubr.f32.mxu0 %v600
    %1745 = vmatmul.mubr.f32.gmra.mrb[0].mxu0 %v560
    %v1746 = vpop.f32.mrb[0].mxu0
    %v1747 = vadd.f32 %v1642, %v1746
    %v1748 = vpop.f32.mrb[0].mxu0
    %1749 = vmatprep.mubr.f32.mxu0 %v601
    %1750 = vmatmul.mubr.f32.gmra.mrb[0].mxu0 %v561
    %v1751 = vpop.f32.mrb[0].mxu0
    %v1752 = vadd.f32 %v1647, %v1751
    %v1753 = vpop.f32.mrb[0].mxu0
    %1754 = vdwg.mxu0
    %1755 = vmatprep.subr.mxu0 0.0
    %1756 = vmatpush1.msra.mxu0 %v1002
    %1757 = vmatprep.subr.mxu0 0.0
    %1758 = vmatpush1.msra.mxu0 %v1003
    %1759 = vmatprep.subr.mxu0 0.0
    %1760 = vmatpush1.msra.mxu0 %v1004
    %1761 = vmatprep.subr.mxu0 0.0
    %1762 = vmatpush1.msra.mxu0 %v1005
    %1763 = vmatprep.subr.mxu0 0.0
    %1764 = vmatpush1.msra.mxu0 %v1006
    %1765 = vmatprep.subr.mxu0 0.0
    %1766 = vmatpush1.msra.mxu0 %v1007
    %1767 = vmatprep.subr.mxu0 0.0
    %1768 = vmatpush1.msra.mxu0 %v1008
    %1769 = vmatprep.subr.mxu0 0.0
    %1770 = vmatpush1.msra.mxu0 %v1009
    %1771 = vmatprep.subr.mxu0 0.0
    %1772 = vmatpush1.msra.mxu0 %v1010
    %1773 = vmatprep.subr.mxu0 0.0
    %1774 = vmatpush1.msra.mxu0 %v1011
    %1775 = vmatprep.subr.mxu0 0.0
    %1776 = vmatpush1.msra.mxu0 %v1012
    %1777 = vmatprep.subr.mxu0 0.0
    %1778 = vmatpush1.msra.mxu0 %v1013
    %1779 = vmatprep.subr.mxu0 0.0
    %1780 = vmatpush1.msra.mxu0 %v1014
    %1781 = vmatprep.subr.mxu0 0.0
    %1782 = vmatpush1.msra.mxu0 %v1015
    %1783 = vmatprep.subr.mxu0 0.0
    %1784 = vmatpush1.msra.mxu0 %v1016
    %1785 = vmatprep.subr.mxu0 0.0
    %1786 = vmatpush1.msra.mxu0 %v1017
    %1787 = vmatprep.subr.mxu0 0.0
    %1788 = vmatpush1.msra.mxu0 %v1018
    %1789 = vmatprep.subr.mxu0 0.0
    %1790 = vmatpush1.msra.mxu0 %v1019
    %1791 = vmatprep.subr.mxu0 0.0
    %1792 = vmatpush1.msra.mxu0 %v1020
    %1793 = vmatprep.subr.mxu0 0.0
    %1794 = vmatpush1.msra.mxu0 %v1021
    %1795 = vmatprep.subr.mxu0 0.0
    %1796 = vmatpush1.msra.mxu0 %v1022
    %1797 = vmatprep.subr.mxu0 0.0
    %1798 = vmatpush1.msra.mxu0 %v1023
    %1799 = vmatprep.subr.mxu0 0.0
    %1800 = vmatpush1.msra.mxu0 %v1024
    %1801 = vmatprep.subr.mxu0 0.0
    %1802 = vmatpush1.msra.mxu0 %v1025
    %1803 = vmatprep.subr.mxu0 0.0
    %1804 = vmatpush1.msra.mxu0 %v1026
    %1805 = vmatprep.subr.mxu0 0.0
    %1806 = vmatpush1.msra.mxu0 %v1027
    %1807 = vmatprep.subr.mxu0 0.0
    %1808 = vmatpush1.msra.mxu0 %v1028
    %1809 = vmatprep.subr.mxu0 0.0
    %1810 = vmatpush1.msra.mxu0 %v1029
    %1811 = vmatprep.subr.mxu0 0.0
    %1812 = vmatpush1.msra.mxu0 %v1030
    %1813 = vmatprep.subr.mxu0 0.0
    %1814 = vmatpush1.msra.mxu0 %v1031
    %1815 = vmatprep.subr.mxu0 0.0
    %1816 = vmatpush1.msra.mxu0 %v1032
    %1817 = vmatprep.subr.mxu0 0.0
    %1818 = vmatpush1.msra.mxu0 %v1033
    %1819 = vmatprep.mubr.f32.mxu0 %v674
    %1820 = vmatmul.mubr.f32.gmra.mrb[0].mxu0 %v634
    %v1821 = vpop.f32.mrb[0].mxu0
    %v1822 = vadd.f32 %v1717, %v1821
    %v1823 = vpop.f32.mrb[0].mxu0
    %1824 = vmatprep.mubr.f32.mxu0 %v675
    %1825 = vmatmul.mubr.f32.gmra.mrb[0].mxu0 %v635
    %v1826 = vpop.f32.mrb[0].mxu0
    %v1827 = vadd.f32 %v1722, %v1826
    %v1828 = vpop.f32.mrb[0].mxu0
    %1829 = vmatprep.mubr.f32.mxu0 %v676
    %1830 = vmatmul.mubr.f32.gmra.mrb[0].mxu0 %v636
    %v1831 = vpop.f32.mrb[0].mxu0
    %v1832 = vadd.f32 %v1727, %v1831
    %v1833 = vpop.f32.mrb[0].mxu0
    %1834 = vmatprep.mubr.f32.mxu0 %v677
    %1835 = vmatmul.mubr.f32.gmra.mrb[0].mxu0 %v637
    %v1836 = vpop.f32.mrb[0].mxu0
    %v1837 = vadd.f32 %v1732, %v1836
    %v1838 = vpop.f32.mrb[0].mxu0
    %1839 = vmatprep.mubr.f32.mxu0 %v678
    %1840 = vmatmul.mubr.f32.gmra.mrb[0].mxu0 %v638
    %v1841 = vpop.f32.mrb[0].mxu0
    %v1842 = vadd.f32 %v1737, %v1841
    %v1843 = vpop.f32.mrb[0].mxu0
    %1844 = vmatprep.mubr.f32.mxu0 %v679
    %1845 = vmatmul.mubr.f32.gmra.mrb[0].mxu0 %v639
    %v1846 = vpop.f32.mrb[0].mxu0
    %v1847 = vadd.f32 %v1742, %v1846
    %v1848 = vpop.f32.mrb[0].mxu0
    %1849 = vmatprep.mubr.f32.mxu0 %v680
    %1850 = vmatmul.mubr.f32.gmra.mrb[0].mxu0 %v640
    %v1851 = vpop.f32.mrb[0].mxu0
    %v1852 = vadd.f32 %v1747, %v1851
    %v1853 = vpop.f32.mrb[0].mxu0
    %1854 = vmatprep.mubr.f32.mxu0 %v681
    %1855 = vmatmul.mubr.f32.gmra.mrb[0].mxu0 %v641
    %v1856 = vpop.f32.mrb[0].mxu0
    %v1857 = vadd.f32 %v1752, %v1856
    %v1858 = vpop.f32.mrb[0].mxu0
    %1859 = vdwg.mxu0
    %1860 = vmatprep.subr.mxu0 0.0
    %1861 = vmatpush1.msra.mxu0 %v1034
    %1862 = vmatprep.subr.mxu0 0.0
    %1863 = vmatpush1.msra.mxu0 %v1035
    %1864 = vmatprep.subr.mxu0 0.0
    %1865 = vmatpush1.msra.mxu0 %v1036
    %1866 = vmatprep.subr.mxu0 0.0
    %1867 = vmatpush1.msra.mxu0 %v1037
    %1868 = vmatprep.subr.mxu0 0.0
    %1869 = vmatpush1.msra.mxu0 %v1038
    %1870 = vmatprep.subr.mxu0 0.0
    %1871 = vmatpush1.msra.mxu0 %v1039
    %1872 = vmatprep.subr.mxu0 0.0
    %1873 = vmatpush1.msra.mxu0 %v1040
    %1874 = vmatprep.subr.mxu0 0.0
    %1875 = vmatpush1.msra.mxu0 %v1041
    %1876 = vmatprep.subr.mxu0 0.0
    %1877 = vmatpush1.msra.mxu0 %v1042
    %1878 = vmatprep.subr.mxu0 0.0
    %1879 = vmatpush1.msra.mxu0 %v1043
    %1880 = vmatprep.subr.mxu0 0.0
    %1881 = vmatpush1.msra.mxu0 %v1044
    %1882 = vmatprep.subr.mxu0 0.0
    %1883 = vmatpush1.msra.mxu0 %v1045
    %1884 = vmatprep.subr.mxu0 0.0
    %1885 = vmatpush1.msra.mxu0 %v1046
    %1886 = vmatprep.subr.mxu0 0.0
    %1887 = vmatpush1.msra.mxu0 %v1047
    %1888 = vmatprep.subr.mxu0 0.0
    %1889 = vmatpush1.msra.mxu0 %v1048
    %1890 = vmatprep.subr.mxu0 0.0
    %1891 = vmatpush1.msra.mxu0 %v1049
    %1892 = vmatprep.subr.mxu0 0.0
    %1893 = vmatpush1.msra.mxu0 %v1050
    %1894 = vmatprep.subr.mxu0 0.0
    %1895 = vmatpush1.msra.mxu0 %v1051
    %1896 = vmatprep.subr.mxu0 0.0
    %1897 = vmatpush1.msra.mxu0 %v1052
    %1898 = vmatprep.subr.mxu0 0.0
    %1899 = vmatpush1.msra.mxu0 %v1053
    %1900 = vmatprep.subr.mxu0 0.0
    %1901 = vmatpush1.msra.mxu0 %v1054
    %1902 = vmatprep.subr.mxu0 0.0
    %1903 = vmatpush1.msra.mxu0 %v1055
    %1904 = vmatprep.subr.mxu0 0.0
    %1905 = vmatpush1.msra.mxu0 %v1056
    %1906 = vmatprep.subr.mxu0 0.0
    %1907 = vmatpush1.msra.mxu0 %v1057
    %1908 = vmatprep.subr.mxu0 0.0
    %1909 = vmatpush1.msra.mxu0 %v1058
    %1910 = vmatprep.subr.mxu0 0.0
    %1911 = vmatpush1.msra.mxu0 %v1059
    %1912 = vmatprep.subr.mxu0 0.0
    %1913 = vmatpush1.msra.mxu0 %v1060
    %1914 = vmatprep.subr.mxu0 0.0
    %1915 = vmatpush1.msra.mxu0 %v1061
    %1916 = vmatprep.subr.mxu0 0.0
    %1917 = vmatpush1.msra.mxu0 %v1062
    %1918 = vmatprep.subr.mxu0 0.0
    %1919 = vmatpush1.msra.mxu0 %v1063
    %1920 = vmatprep.subr.mxu0 0.0
    %1921 = vmatpush1.msra.mxu0 %v1064
    %1922 = vmatprep.subr.mxu0 0.0
    %1923 = vmatpush1.msra.mxu0 %v1065
    %1924 = vmatprep.mubr.f32.mxu0 %v754
    %1925 = vmatmul.mubr.f32.gmra.mrb[0].mxu0 %v714
    %v1926 = vpop.f32.mrb[0].mxu0
    %v1927 = vadd.f32 %v1822, %v1926
    %v1928 = vpop.f32.mrb[0].mxu0
    %1929 = vmatprep.mubr.f32.mxu0 %v755
    %1930 = vmatmul.mubr.f32.gmra.mrb[0].mxu0 %v715
    %v1931 = vpop.f32.mrb[0].mxu0
    %v1932 = vadd.f32 %v1827, %v1931
    %v1933 = vpop.f32.mrb[0].mxu0
    %1934 = vmatprep.mubr.f32.mxu0 %v756
    %1935 = vmatmul.mubr.f32.gmra.mrb[0].mxu0 %v716
    %v1936 = vpop.f32.mrb[0].mxu0
    %v1937 = vadd.f32 %v1832, %v1936
    %v1938 = vpop.f32.mrb[0].mxu0
    %1939 = vmatprep.mubr.f32.mxu0 %v757
    %1940 = vmatmul.mubr.f32.gmra.mrb[0].mxu0 %v717
    %v1941 = vpop.f32.mrb[0].mxu0
    %v1942 = vadd.f32 %v1837, %v1941
    %v1943 = vpop.f32.mrb[0].mxu0
    %1944 = vmatprep.mubr.f32.mxu0 %v758
    %1945 = vmatmul.mubr.f32.gmra.mrb[0].mxu0 %v718
    %v1946 = vpop.f32.mrb[0].mxu0
    %v1947 = vadd.f32 %v1842, %v1946
    %v1948 = vpop.f32.mrb[0].mxu0
    %1949 = vmatprep.mubr.f32.mxu0 %v759
    %1950 = vmatmul.mubr.f32.gmra.mrb[0].mxu0 %v719
    %v1951 = vpop.f32.mrb[0].mxu0
    %v1952 = vadd.f32 %v1847, %v1951
    %v1953 = vpop.f32.mrb[0].mxu0
    %1954 = vmatprep.mubr.f32.mxu0 %v760
    %1955 = vmatmul.mubr.f32.gmra.mrb[0].mxu0 %v720
    %v1956 = vpop.f32.mrb[0].mxu0
    %v1957 = vadd.f32 %v1852, %v1956
    %v1958 = vpop.f32.mrb[0].mxu0
    %1959 = vmatprep.mubr.f32.mxu0 %v761
    %1960 = vmatmul.mubr.f32.gmra.mrb[0].mxu0 %v721
    %v1961 = vpop.f32.mrb[0].mxu0
    %v1962 = vadd.f32 %v1857, %v1961
    %v1963 = vpop.f32.mrb[0].mxu0
    %1964 = vdwg.mxu0
    %1965 = vmatprep.subr.mxu0 0.0
    %1966 = vmatpush1.msra.mxu0 %v1066
    %1967 = vmatprep.subr.mxu0 0.0
    %1968 = vmatpush1.msra.mxu0 %v1067
    %1969 = vmatprep.subr.mxu0 0.0
    %1970 = vmatpush1.msra.mxu0 %v1068
    %1971 = vmatprep.subr.mxu0 0.0
    %1972 = vmatpush1.msra.mxu0 %v1069
    %1973 = vmatprep.subr.mxu0 0.0
    %1974 = vmatpush1.msra.mxu0 %v1070
    %1975 = vmatprep.subr.mxu0 0.0
    %1976 = vmatpush1.msra.mxu0 %v1071
    %1977 = vmatprep.subr.mxu0 0.0
    %1978 = vmatpush1.msra.mxu0 %v1072
    %1979 = vmatprep.subr.mxu0 0.0
    %1980 = vmatpush1.msra.mxu0 %v1073
    %1981 = vmatprep.subr.mxu0 0.0
    %1982 = vmatpush1.msra.mxu0 %v1074
    %1983 = vmatprep.subr.mxu0 0.0
    %1984 = vmatpush1.msra.mxu0 %v1075
    %1985 = vmatprep.subr.mxu0 0.0
    %1986 = vmatpush1.msra.mxu0 %v1076
    %1987 = vmatprep.subr.mxu0 0.0
    %1988 = vmatpush1.msra.mxu0 %v1077
    %1989 = vmatprep.subr.mxu0 0.0
    %1990 = vmatpush1.msra.mxu0 %v1078
    %1991 = vmatprep.subr.mxu0 0.0
    %1992 = vmatpush1.msra.mxu0 %v1079
    %1993 = vmatprep.subr.mxu0 0.0
    %1994 = vmatpush1.msra.mxu0 %v1080
    %1995 = vmatprep.subr.mxu0 0.0
    %1996 = vmatpush1.msra.mxu0 %v1081
    %1997 = vmatprep.subr.mxu0 0.0
    %1998 = vmatpush1.msra.mxu0 %v1082
    %1999 = vmatprep.subr.mxu0 0.0
    %2000 = vmatpush1.msra.mxu0 %v1083
    %2001 = vmatprep.subr.mxu0 0.0
    %2002 = vmatpush1.msra.mxu0 %v1084
    %2003 = vmatprep.subr.mxu0 0.0
    %2004 = vmatpush1.msra.mxu0 %v1085
    %2005 = vmatprep.subr.mxu0 0.0
    %2006 = vmatpush1.msra.mxu0 %v1086
    %2007 = vmatprep.subr.mxu0 0.0
    %2008 = vmatpush1.msra.mxu0 %v1087
    %2009 = vmatprep.subr.mxu0 0.0
    %2010 = vmatpush1.msra.mxu0 %v1088
    %2011 = vmatprep.subr.mxu0 0.0
    %2012 = vmatpush1.msra.mxu0 %v1089
    %2013 = vmatprep.subr.mxu0 0.0
    %2014 = vmatpush1.msra.mxu0 %v1090
    %2015 = vmatprep.subr.mxu0 0.0
    %2016 = vmatpush1.msra.mxu0 %v1091
    %2017 = vmatprep.subr.mxu0 0.0
    %2018 = vmatpush1.msra.mxu0 %v1092
    %2019 = vmatprep.subr.mxu0 0.0
    %2020 = vmatpush1.msra.mxu0 %v1093
    %2021 = vmatprep.subr.mxu0 0.0
    %2022 = vmatpush1.msra.mxu0 %v1094
    %2023 = vmatprep.subr.mxu0 0.0
    %2024 = vmatpush1.msra.mxu0 %v1095
    %2025 = vmatprep.subr.mxu0 0.0
    %2026 = vmatpush1.msra.mxu0 %v1096
    %2027 = vmatprep.subr.mxu0 0.0
    %2028 = vmatpush1.msra.mxu0 %v1097
    %2029 = vmatprep.mubr.f32.mxu0 %v834
    %2030 = vmatmul.mubr.f32.gmra.mrb[0].mxu0 %v794
    %v2031 = vpop.f32.mrb[0].mxu0
    %v2032 = vadd.f32 %v1927, %v2031
    %v2033 = vpop.f32.mrb[0].mxu0
    %2034 = vmatprep.mubr.f32.mxu0 %v835
    %2035 = vmatmul.mubr.f32.gmra.mrb[0].mxu0 %v795
    %v2036 = vpop.f32.mrb[0].mxu0
    %v2037 = vadd.f32 %v1932, %v2036
    %v2038 = vpop.f32.mrb[0].mxu0
    %2039 = vmatprep.mubr.f32.mxu0 %v836
    %2040 = vmatmul.mubr.f32.gmra.mrb[0].mxu0 %v796
    %v2041 = vpop.f32.mrb[0].mxu0
    %v2042 = vadd.f32 %v1937, %v2041
    %v2043 = vpop.f32.mrb[0].mxu0
    %2044 = vmatprep.mubr.f32.mxu0 %v837
    %2045 = vmatmul.mubr.f32.gmra.mrb[0].mxu0 %v797
    %v2046 = vpop.f32.mrb[0].mxu0
    %v2047 = vadd.f32 %v1942, %v2046
    %v2048 = vpop.f32.mrb[0].mxu0
    %2049 = vmatprep.mubr.f32.mxu0 %v838
    %2050 = vmatmul.mubr.f32.gmra.mrb[0].mxu0 %v798
    %v2051 = vpop.f32.mrb[0].mxu0
    %v2052 = vadd.f32 %v1947, %v2051
    %v2053 = vpop.f32.mrb[0].mxu0
    %2054 = vmatprep.mubr.f32.mxu0 %v839
    %2055 = vmatmul.mubr.f32.gmra.mrb[0].mxu0 %v799
    %v2056 = vpop.f32.mrb[0].mxu0
    %v2057 = vadd.f32 %v1952, %v2056
    %v2058 = vpop.f32.mrb[0].mxu0
    %2059 = vmatprep.mubr.f32.mxu0 %v840
    %2060 = vmatmul.mubr.f32.gmra.mrb[0].mxu0 %v800
    %v2061 = vpop.f32.mrb[0].mxu0
    %v2062 = vadd.f32 %v1957, %v2061
    %v2063 = vpop.f32.mrb[0].mxu0
    %2064 = vmatprep.mubr.f32.mxu0 %v841
    %2065 = vmatmul.mubr.f32.gmra.mrb[0].mxu0 %v801
    %v2066 = vpop.f32.mrb[0].mxu0
    %v2067 = vadd.f32 %v1962, %v2066
    %v2068 = vpop.f32.mrb[0].mxu0
    %2069 = vdwg.mxu0
    %2070 = vst [vmem:[#allocation5] sm:$0xff] %v2032
    %2071 = vst [vmem:[#allocation5 + $0x8] sm:$0xff] %v2037
    %2072 = vst [vmem:[#allocation5 + $0x10] sm:$0xff] %v2042
    %2073 = vst [vmem:[#allocation5 + $0x18] sm:$0xff] %v2047
    %2074 = vst [vmem:[#allocation5 + $0x20] sm:$0xff] %v2052
    %2075 = vst [vmem:[#allocation5 + $0x28] sm:$0xff] %v2057
    %2076 = vst [vmem:[#allocation5 + $0x30] sm:$0xff] %v2062
    %2077 = vst [vmem:[#allocation5 + $0x38] sm:$0xff] %v2067
    // Predicated region
    $region22: #{tpu_custom_call.1} parent=1 // pred_check
      _
    $region23: #{tpu_custom_call.1} parent=1 // pred_check_branch
      %2079 = sbr.rel (0) target = $region25
    $region24: #{tpu_custom_call.1} parent=1 // pred_region
      %s2081 = ssub.s32 1024, 1024
      %2082 = vsyncadd [#allocation4], %s2081
      %s2083 = sshll.u32 [#allocation5], 4
      %s2084 = int_to_ptr.vmem [resolvable:$true] %s2083
      %2089 = dma.vmem_to_hbm [thread:$0]  %s2084, 1024, %s4, [#allocation4], 128, 128, 8
    $region25: #{tpu_custom_call.1} parent=1 // pred_fallthru
      _
    // Predicated region
    $region26: #{tpu_custom_call.1} parent=1 // pred_check
      _
    $region27: #{tpu_custom_call.1} parent=1 // pred_check_branch
      %2091 = sbr.rel (0) target = $region29
    $region28: #{tpu_custom_call.1} parent=1 // pred_region
      %2092 = dma.done [#allocation4], 1024
    $region29: #{tpu_custom_call.1} parent=1 // pred_fallthru
      _
    %2093 = vsyncpa [#allocation3], 1
    %2094 = vsyncpa [#allocation4], 1

</llo_original>
